<compile_context>
chip_gen: v7x
topology: tpu7x:2x2x1
jax: 0.10.0
libtpu: 0.0.40
codegen_flags: <defaults>
</compile_context>

<pallas_src>
import jax
import jax.numpy as jnp
from jax import lax
from jax.experimental import pallas as pl
from jax.experimental.pallas import tpu as pltpu

HIDDEN_SIZE = 50          # fixed by the module
HP = 64                   # lane-friendly padded hidden size (4*HP = 256)
EMBED_DIM = 32            # word2vec embedding dim (synthetic stand-in)
VOCAB = 100               # synthetic vocab
NUM_CLASSES = 4
BATCH = 2
SEQ = 8


# ----------------------------------- kernel -------------------------------------

def _bilstm_text_kernel(tok_ref,     # (B, T)       int32, SMEM
                        xtab_ref,    # (V, 8*Hp)    f32, VMEM: embedding @ [Wih_f|Wih_b] + b
                        whh_ref,     # (Hp, 8*Hp)   f32, VMEM: [Whh_f | Whh_b], gate-packed
                        head_ref,    # (2*Hp+8, C)  f32, VMEM: [Wfc_f ; Wfc_b ; b_fc]
                        out_ref):    # (B, C)       f32, VMEM
    B, T = tok_ref.shape
    Hp = whh_ref.shape[0]
    G = 4 * Hp

    # ---- fused embedding lookup + input projection (pre-multiplied table), time-major ----
    rows = [xtab_ref[pl.ds(tok_ref[b, t], 1), :] for t in range(T) for b in range(B)]
    xg = jnp.concatenate(rows, axis=0).reshape(T, B, 2 * G)   # (T, B, [fwd gates | bwd gates])

    whh = whh_ref[...]                                        # (Hp, 2G)
    # rows 0:B carry the forward direction, rows B:2B the backward direction (hoisted mask)
    row_is_fwd = lax.broadcasted_iota(jnp.int32, (2 * B, G), 0) < B

    h = jnp.zeros((2 * B, Hp), jnp.float32)                   # [h_fwd ; h_bwd]
    c = jnp.zeros((2 * B, Hp), jnp.float32)

    # ---- fused fwd+bwd recurrence, fully unrolled (T static & tiny) ----
    # ONE stacked MXU matmul per step; fwd consumes t, bwd consumes T-1-t.
    for t in range(T):
        x_t = jnp.concatenate([xg[t, :, :G], xg[T - 1 - t, :, G:]], axis=0)   # (2B, G)
        hw = jnp.dot(h, whh, preferred_element_type=jnp.float32)              # (2B, 2G)
        gates = x_t + jnp.where(row_is_fwd, hw[:, :G], hw[:, G:])             # diag blocks
        # gate layout [i, f, o, g]: one wide sigmoid + one tanh per step
        sig = jax.nn.sigmoid(gates[:, :3 * Hp])
        g = jnp.tanh(gates[:, 3 * Hp:])
        i = sig[:, 0 * Hp:1 * Hp]
        f = sig[:, 1 * Hp:2 * Hp]
        o = sig[:, 2 * Hp:3 * Hp]
        c = f * c + i * g
        h = o * jnp.tanh(c)

    # ---- fc on [h_fwd ; h_bwd] (no lane-axis concat), then exact softmax(dim=1) ----
    wfc_f = head_ref[0:Hp, :]
    wfc_b = head_ref[Hp:2 * Hp, :]
    bfc = head_ref[2 * Hp:2 * Hp + 1, :]
    logits = (jnp.dot(h[:B], wfc_f, preferred_element_type=jnp.float32)
              + jnp.dot(h[B:], wfc_b, preferred_element_type=jnp.float32)
              + bfc)
    m = jnp.max(logits, axis=1, keepdims=True)
    e = jnp.exp(logits - m)
    out_ref[...] = e / jnp.sum(e, axis=1, keepdims=True)      # exact: row sums == 1


# ------------------------- parameter creation & packing -------------------------

def make_params(key):
    ks = jax.random.split(key, 10)
    u = lambda k, shape, s=0.1: jax.random.uniform(k, shape, jnp.float32, -s, s)
    H, E, C = HIDDEN_SIZE, EMBED_DIM, NUM_CLASSES
    return {
        "embedding": u(ks[0], (VOCAB, E), 0.5),   # frozen word2vec stand-in
        # forward direction LSTM (bias = b_ih + b_hh folded into one vector)
        "wih_f": u(ks[1], (4 * H, E)),
        "whh_f": u(ks[2], (4 * H, H)),
        "b_f":   u(ks[3], (4 * H,)),
        # backward direction LSTM
        "wih_b": u(ks[4], (4 * H, E)),
        "whh_b": u(ks[5], (4 * H, H)),
        "b_b":   u(ks[6], (4 * H,)),
        # fc head
        "wfc":   u(ks[7], (C, 2 * H)),
        "bfc":   u(ks[8], (C,)),
    }


_GATE_ORDER = (0, 1, 3, 2)   # PyTorch [i, f, g, o] -> kernel [i, f, o, g]


def _pack_gate_cols(w, H, Hp):
    """PyTorch (4H, K) [i,f,g,o]-stacked -> (K, 4*Hp), repacked [i,f,o,g], zero-padded."""
    K = w.shape[1]
    out = jnp.zeros((K, 4 * Hp), w.dtype)
    for slot, gt in enumerate(_GATE_ORDER):
        out = out.at[:, slot * Hp:slot * Hp + H].set(w[gt * H:(gt + 1) * H, :].T)
    return out


def _pack_gate_bias(b, H, Hp):
    out = jnp.zeros((4 * Hp,), b.dtype)
    for slot, gt in enumerate(_GATE_ORDER):
        out = out.at[slot * Hp:slot * Hp + H].set(b[gt * H:(gt + 1) * H])
    return out


def _pad_rows(w, Hp):
    K, N = w.shape
    return jnp.zeros((Hp, N), w.dtype).at[:K, :].set(w)


def prepare_kernel_params(params, Hp=HP):
    """One-time pack (outside the per-call forward): gate repack/pad, pre-multiply the
    frozen embedding table by Wih (+bias), fuse the fc head into one buffer."""
    H = HIDDEN_SIZE
    C = params["bfc"].shape[0]
    wih = jnp.concatenate([_pack_gate_cols(params["wih_f"], H, Hp),
                           _pack_gate_cols(params["wih_b"], H, Hp)], axis=1)    # (E, 8Hp)
    b = jnp.concatenate([_pack_gate_bias(params["b_f"], H, Hp),
                         _pack_gate_bias(params["b_b"], H, Hp)])[None, :]       # (1, 8Hp)
    # Embedding is frozen (from_pretrained, freeze=True) and dropout is identity in eval,
    # so the input projection can be applied to the whole table once (exact, bias only in
    # real-H columns so padded gate columns remain zero).
    xtab = params["embedding"].astype(jnp.float32) @ wih + b                    # (V, 8Hp)
    whh = jnp.concatenate([_pad_rows(_pack_gate_cols(params["whh_f"], H, Hp), Hp),
                           _pad_rows(_pack_gate_cols(params["whh_b"], H, Hp), Hp)],
                          axis=1)                                               # (Hp, 8Hp)
    head = jnp.zeros((2 * Hp + 8, C), jnp.float32)
    head = head.at[:H, :].set(params["wfc"][:, :H].T)                           # Wfc_f
    head = head.at[Hp:Hp + H, :].set(params["wfc"][:, H:].T)                    # Wfc_b
    head = head.at[2 * Hp, :].set(params["bfc"])                                # b_fc
    return {"xtab": xtab, "whh": whh, "head": head}


# ------------------------------- forward wrapper --------------------------------

@jax.jit
def text_model_forward(token_ids, kp):
    # nn.Dropout(0.5) is the identity in eval mode.
    # TODO(synk): add a stochastic dropout mask (pltpu.prng_random_bits) if training-mode
    #             semantics are ever needed.
    B = token_ids.shape[0]
    C = kp["head"].shape[1]
    smem = pl.BlockSpec(memory_space=pltpu.MemorySpace.SMEM)
    vmem = pl.BlockSpec(memory_space=pltpu.MemorySpace.VMEM)
    return pl.pallas_call(
        _bilstm_text_kernel,
        out_shape=jax.ShapeDtypeStruct((B, C), jnp.float32),
        in_specs=[smem, vmem, vmem, vmem],
        out_specs=vmem,
    )(token_ids.astype(jnp.int32), kp["xtab"], kp["whh"], kp["head"])


# -------------------------------- pure-JAX reference -----------------------------

def _reference_forward(token_ids, params):
    """Pure-JAX reference mirroring the PyTorch forward (eval mode)."""
    H = HIDDEN_SIZE
    emb = jnp.take(params["embedding"], token_ids, axis=0)       # (B, T, E)

    def cell(x_t, h, c, wih, whh, b):
        gates = x_t @ wih.T + h @ whh.T + b
        i = jax.nn.sigmoid(gates[:, 0 * H:1 * H])
        f = jax.nn.sigmoid(gates[:, 1 * H:2 * H])
        g = jnp.tanh(gates[:, 2 * H:3 * H])
        o = jax.nn.sigmoid(gates[:, 3 * H:4 * H])
        c = f * c + i * g
        return o * jnp.tanh(c), c

    B, T, _ = emb.shape
    h = c = jnp.zeros((B, H), jnp.float32)
    for t in range(T):
        h, c = cell(emb[:, t], h, c, params["wih_f"], params["whh_f"], params["b_f"])
    h_fwd = h
    h = c = jnp.zeros((B, H), jnp.float32)
    for t in range(T - 1, -1, -1):
        h, c = cell(emb[:, t], h, c, params["wih_b"], params["whh_b"], params["b_b"])
    h_bwd = h
    hcat = jnp.concatenate([h_fwd, h_bwd], axis=1)
    logits = hcat @ params["wfc"].T + params["bfc"]
    return jax.nn.softmax(logits, axis=1)


if __name__ == "__main__":
    key = jax.random.PRNGKey(0)
    k_tok, k_par = jax.random.split(key)
    token_ids = jax.random.randint(k_tok, (BATCH, SEQ), 0, VOCAB, dtype=jnp.int32)
    params = make_params(k_par)
    kernel_params = prepare_kernel_params(params)      # one-time pack/pad, not per call

    out = text_model_forward(token_ids, kernel_params)
    out = jax.block_until_ready(out)

    ref = _reference_forward(token_ids, params)
    assert out.shape == (BATCH, NUM_CLASSES), out.shape
    assert jnp.allclose(out, ref, rtol=1e-3, atol=1e-3), (out, ref)
    assert jnp.allclose(jnp.sum(out, axis=1), 1.0, atol=1e-3)

    print("KERNEL_OK")
</pallas_src>

<mosaic_0001>
module attributes {stable_mosaic.version = 11 : i64} {
  func.func @_bilstm_text_kernel(%arg0: memref<2x8xi32, #tpu.memory_space<smem>>, %arg1: memref<100x512xf32, #tpu.memory_space<vmem>>, %arg2: memref<64x512xf32, #tpu.memory_space<vmem>>, %arg3: memref<136x4xf32, #tpu.memory_space<vmem>>, %arg4: memref<2x4xf32, #tpu.memory_space<vmem>>) attributes {dimension_semantics = [], scalar_prefetch = 0 : i64, scratch_operands = 0 : i64, tpu.core_type = #tpu.core_type<tc>} {
    %c0 = arith.constant 0 : index
    %c0_0 = arith.constant 0 : index
    %0 = memref.load %arg0[%c0, %c0_0] : memref<2x8xi32, #tpu.memory_space<smem>>
    %1 = arith.index_cast %0 : i32 to index
    %c0_1 = arith.constant 0 : index
    %2 = vector.load %arg1[%1, %c0_1] : memref<100x512xf32, #tpu.memory_space<vmem>>, vector<1x512xf32>
    %c1 = arith.constant 1 : index
    %c0_2 = arith.constant 0 : index
    %3 = memref.load %arg0[%c1, %c0_2] : memref<2x8xi32, #tpu.memory_space<smem>>
    %4 = arith.index_cast %3 : i32 to index
    %c0_3 = arith.constant 0 : index
    %5 = vector.load %arg1[%4, %c0_3] : memref<100x512xf32, #tpu.memory_space<vmem>>, vector<1x512xf32>
    %c0_4 = arith.constant 0 : index
    %c1_5 = arith.constant 1 : index
    %6 = memref.load %arg0[%c0_4, %c1_5] : memref<2x8xi32, #tpu.memory_space<smem>>
    %7 = arith.index_cast %6 : i32 to index
    %c0_6 = arith.constant 0 : index
    %8 = vector.load %arg1[%7, %c0_6] : memref<100x512xf32, #tpu.memory_space<vmem>>, vector<1x512xf32>
    %c1_7 = arith.constant 1 : index
    %c1_8 = arith.constant 1 : index
    %9 = memref.load %arg0[%c1_7, %c1_8] : memref<2x8xi32, #tpu.memory_space<smem>>
    %10 = arith.index_cast %9 : i32 to index
    %c0_9 = arith.constant 0 : index
    %11 = vector.load %arg1[%10, %c0_9] : memref<100x512xf32, #tpu.memory_space<vmem>>, vector<1x512xf32>
    %c0_10 = arith.constant 0 : index
    %c2 = arith.constant 2 : index
    %12 = memref.load %arg0[%c0_10, %c2] : memref<2x8xi32, #tpu.memory_space<smem>>
    %13 = arith.index_cast %12 : i32 to index
    %c0_11 = arith.constant 0 : index
    %14 = vector.load %arg1[%13, %c0_11] : memref<100x512xf32, #tpu.memory_space<vmem>>, vector<1x512xf32>
    %c1_12 = arith.constant 1 : index
    %c2_13 = arith.constant 2 : index
    %15 = memref.load %arg0[%c1_12, %c2_13] : memref<2x8xi32, #tpu.memory_space<smem>>
    %16 = arith.index_cast %15 : i32 to index
    %c0_14 = arith.constant 0 : index
    %17 = vector.load %arg1[%16, %c0_14] : memref<100x512xf32, #tpu.memory_space<vmem>>, vector<1x512xf32>
    %c0_15 = arith.constant 0 : index
    %c3 = arith.constant 3 : index
    %18 = memref.load %arg0[%c0_15, %c3] : memref<2x8xi32, #tpu.memory_space<smem>>
    %19 = arith.index_cast %18 : i32 to index
    %c0_16 = arith.constant 0 : index
    %20 = vector.load %arg1[%19, %c0_16] : memref<100x512xf32, #tpu.memory_space<vmem>>, vector<1x512xf32>
    %c1_17 = arith.constant 1 : index
    %c3_18 = arith.constant 3 : index
    %21 = memref.load %arg0[%c1_17, %c3_18] : memref<2x8xi32, #tpu.memory_space<smem>>
    %22 = arith.index_cast %21 : i32 to index
    %c0_19 = arith.constant 0 : index
    %23 = vector.load %arg1[%22, %c0_19] : memref<100x512xf32, #tpu.memory_space<vmem>>, vector<1x512xf32>
    %c0_20 = arith.constant 0 : index
    %c4 = arith.constant 4 : index
    %24 = memref.load %arg0[%c0_20, %c4] : memref<2x8xi32, #tpu.memory_space<smem>>
    %25 = arith.index_cast %24 : i32 to index
    %c0_21 = arith.constant 0 : index
    %26 = vector.load %arg1[%25, %c0_21] : memref<100x512xf32, #tpu.memory_space<vmem>>, vector<1x512xf32>
    %c1_22 = arith.constant 1 : index
    %c4_23 = arith.constant 4 : index
    %27 = memref.load %arg0[%c1_22, %c4_23] : memref<2x8xi32, #tpu.memory_space<smem>>
    %28 = arith.index_cast %27 : i32 to index
    %c0_24 = arith.constant 0 : index
    %29 = vector.load %arg1[%28, %c0_24] : memref<100x512xf32, #tpu.memory_space<vmem>>, vector<1x512xf32>
    %c0_25 = arith.constant 0 : index
    %c5 = arith.constant 5 : index
    %30 = memref.load %arg0[%c0_25, %c5] : memref<2x8xi32, #tpu.memory_space<smem>>
    %31 = arith.index_cast %30 : i32 to index
    %c0_26 = arith.constant 0 : index
    %32 = vector.load %arg1[%31, %c0_26] : memref<100x512xf32, #tpu.memory_space<vmem>>, vector<1x512xf32>
    %c1_27 = arith.constant 1 : index
    %c5_28 = arith.constant 5 : index
    %33 = memref.load %arg0[%c1_27, %c5_28] : memref<2x8xi32, #tpu.memory_space<smem>>
    %34 = arith.index_cast %33 : i32 to index
    %c0_29 = arith.constant 0 : index
    %35 = vector.load %arg1[%34, %c0_29] : memref<100x512xf32, #tpu.memory_space<vmem>>, vector<1x512xf32>
    %c0_30 = arith.constant 0 : index
    %c6 = arith.constant 6 : index
    %36 = memref.load %arg0[%c0_30, %c6] : memref<2x8xi32, #tpu.memory_space<smem>>
    %37 = arith.index_cast %36 : i32 to index
    %c0_31 = arith.constant 0 : index
    %38 = vector.load %arg1[%37, %c0_31] : memref<100x512xf32, #tpu.memory_space<vmem>>, vector<1x512xf32>
    %c1_32 = arith.constant 1 : index
    %c6_33 = arith.constant 6 : index
    %39 = memref.load %arg0[%c1_32, %c6_33] : memref<2x8xi32, #tpu.memory_space<smem>>
    %40 = arith.index_cast %39 : i32 to index
    %c0_34 = arith.constant 0 : index
    %41 = vector.load %arg1[%40, %c0_34] : memref<100x512xf32, #tpu.memory_space<vmem>>, vector<1x512xf32>
    %c0_35 = arith.constant 0 : index
    %c7 = arith.constant 7 : index
    %42 = memref.load %arg0[%c0_35, %c7] : memref<2x8xi32, #tpu.memory_space<smem>>
    %43 = arith.index_cast %42 : i32 to index
    %c0_36 = arith.constant 0 : index
    %44 = vector.load %arg1[%43, %c0_36] : memref<100x512xf32, #tpu.memory_space<vmem>>, vector<1x512xf32>
    %c1_37 = arith.constant 1 : index
    %c7_38 = arith.constant 7 : index
    %45 = memref.load %arg0[%c1_37, %c7_38] : memref<2x8xi32, #tpu.memory_space<smem>>
    %46 = arith.index_cast %45 : i32 to index
    %c0_39 = arith.constant 0 : index
    %47 = vector.load %arg1[%46, %c0_39] : memref<100x512xf32, #tpu.memory_space<vmem>>, vector<1x512xf32>
    %48 = tpu.concatenate %2, %5, %8, %11, %14, %17, %20, %23, %26, %29, %32, %35, %38, %41, %44, %47 in 0 : vector<1x512xf32>, vector<1x512xf32>, vector<1x512xf32>, vector<1x512xf32>, vector<1x512xf32>, vector<1x512xf32>, vector<1x512xf32>, vector<1x512xf32>, vector<1x512xf32>, vector<1x512xf32>, vector<1x512xf32>, vector<1x512xf32>, vector<1x512xf32>, vector<1x512xf32>, vector<1x512xf32>, vector<1x512xf32> -> vector<16x512xf32>
    %49 = vector.shape_cast %48 : vector<16x512xf32> to vector<8x2x512xf32>
    %c0_40 = arith.constant 0 : index
    %c0_41 = arith.constant 0 : index
    %50 = vector.load %arg2[%c0_40, %c0_41] : memref<64x512xf32, #tpu.memory_space<vmem>>, vector<64x512xf32>
    %51 = tpu.iota {dimensions = array<i32: 0>} : vector<4x256xi32>
    %c2_i32 = arith.constant 2 : i32
    %52 = vector.broadcast %c2_i32 : i32 to vector<4x256xi32>
    %53 = arith.cmpi slt, %51, %52 : vector<4x256xi32>
    %cst = arith.constant 0.000000e+00 : f32
    %54 = vector.broadcast %cst : f32 to vector<4x64xf32>
    %cst_42 = arith.constant 0.000000e+00 : f32
    %55 = vector.broadcast %cst_42 : f32 to vector<4x64xf32>
    %56 = vector.extract_strided_slice %49 {offsets = [0, 0, 0], sizes = [1, 2, 256], strides = [1, 1, 1]} : vector<8x2x512xf32> to vector<1x2x256xf32>
    %57 = vector.shape_cast %56 : vector<1x2x256xf32> to vector<2x256xf32>
    %58 = vector.extract_strided_slice %49 {offsets = [7, 0, 256], sizes = [1, 2, 256], strides = [1, 1, 1]} : vector<8x2x512xf32> to vector<1x2x256xf32>
    %59 = vector.shape_cast %58 : vector<1x2x256xf32> to vector<2x256xf32>
    %60 = tpu.concatenate %57, %59 in 0 : vector<2x256xf32>, vector<2x256xf32> -> vector<4x256xf32>
    %cst_43 = arith.constant dense<0.000000e+00> : vector<4x512xf32>
    %61 = tpu.matmul %54, %50, %cst_43 {dimension_numbers = #tpu.dot_dimension_numbers<[1], [0], [0], [1], [0, 0, 1, 1], [], []>} : vector<4x64xf32>, vector<64x512xf32>, vector<4x512xf32> -> vector<4x512xf32>
    %62 = vector.extract_strided_slice %61 {offsets = [0, 0], sizes = [4, 256], strides = [1, 1]} : vector<4x512xf32> to vector<4x256xf32>
    %63 = vector.extract_strided_slice %61 {offsets = [0, 256], sizes = [4, 256], strides = [1, 1]} : vector<4x512xf32> to vector<4x256xf32>
    %64 = arith.select %53, %62, %63 : vector<4x256xi1>, vector<4x256xf32>
    %65 = arith.addf %60, %64 : vector<4x256xf32>
    %66 = vector.extract_strided_slice %65 {offsets = [0, 0], sizes = [4, 192], strides = [1, 1]} : vector<4x256xf32> to vector<4x192xf32>
    %67 = arith.negf %66 : vector<4x192xf32>
    %68 = math.exp %67 : vector<4x192xf32>
    %cst_44 = arith.constant 1.000000e+00 : f32
    %69 = vector.broadcast %cst_44 : f32 to vector<4x192xf32>
    %70 = arith.addf %69, %68 : vector<4x192xf32>
    %71 = arith.divf %69, %70 : vector<4x192xf32>
    %72 = vector.extract_strided_slice %65 {offsets = [0, 192], sizes = [4, 64], strides = [1, 1]} : vector<4x256xf32> to vector<4x64xf32>
    %73 = math.tanh %72 : vector<4x64xf32>
    %74 = vector.extract_strided_slice %71 {offsets = [0, 0], sizes = [4, 64], strides = [1, 1]} : vector<4x192xf32> to vector<4x64xf32>
    %75 = vector.extract_strided_slice %71 {offsets = [0, 64], sizes = [4, 64], strides = [1, 1]} : vector<4x192xf32> to vector<4x64xf32>
    %76 = vector.extract_strided_slice %71 {offsets = [0, 128], sizes = [4, 64], strides = [1, 1]} : vector<4x192xf32> to vector<4x64xf32>
    %77 = arith.mulf %75, %55 : vector<4x64xf32>
    %78 = arith.mulf %74, %73 : vector<4x64xf32>
    %79 = arith.addf %77, %78 : vector<4x64xf32>
    %80 = math.tanh %79 : vector<4x64xf32>
    %81 = arith.mulf %76, %80 : vector<4x64xf32>
    %82 = vector.extract_strided_slice %49 {offsets = [1, 0, 0], sizes = [1, 2, 256], strides = [1, 1, 1]} : vector<8x2x512xf32> to vector<1x2x256xf32>
    %83 = vector.shape_cast %82 : vector<1x2x256xf32> to vector<2x256xf32>
    %84 = vector.extract_strided_slice %49 {offsets = [6, 0, 256], sizes = [1, 2, 256], strides = [1, 1, 1]} : vector<8x2x512xf32> to vector<1x2x256xf32>
    %85 = vector.shape_cast %84 : vector<1x2x256xf32> to vector<2x256xf32>
    %86 = tpu.concatenate %83, %85 in 0 : vector<2x256xf32>, vector<2x256xf32> -> vector<4x256xf32>
    %cst_45 = arith.constant dense<0.000000e+00> : vector<4x512xf32>
    %87 = tpu.matmul %81, %50, %cst_45 {dimension_numbers = #tpu.dot_dimension_numbers<[1], [0], [0], [1], [0, 0, 1, 1], [], []>} : vector<4x64xf32>, vector<64x512xf32>, vector<4x512xf32> -> vector<4x512xf32>
    %88 = vector.extract_strided_slice %87 {offsets = [0, 0], sizes = [4, 256], strides = [1, 1]} : vector<4x512xf32> to vector<4x256xf32>
    %89 = vector.extract_strided_slice %87 {offsets = [0, 256], sizes = [4, 256], strides = [1, 1]} : vector<4x512xf32> to vector<4x256xf32>
    %90 = arith.select %53, %88, %89 : vector<4x256xi1>, vector<4x256xf32>
    %91 = arith.addf %86, %90 : vector<4x256xf32>
    %92 = vector.extract_strided_slice %91 {offsets = [0, 0], sizes = [4, 192], strides = [1, 1]} : vector<4x256xf32> to vector<4x192xf32>
    %93 = arith.negf %92 : vector<4x192xf32>
    %94 = math.exp %93 : vector<4x192xf32>
    %cst_46 = arith.constant 1.000000e+00 : f32
    %95 = vector.broadcast %cst_46 : f32 to vector<4x192xf32>
    %96 = arith.addf %95, %94 : vector<4x192xf32>
    %97 = arith.divf %95, %96 : vector<4x192xf32>
    %98 = vector.extract_strided_slice %91 {offsets = [0, 192], sizes = [4, 64], strides = [1, 1]} : vector<4x256xf32> to vector<4x64xf32>
    %99 = math.tanh %98 : vector<4x64xf32>
    %100 = vector.extract_strided_slice %97 {offsets = [0, 0], sizes = [4, 64], strides = [1, 1]} : vector<4x192xf32> to vector<4x64xf32>
    %101 = vector.extract_strided_slice %97 {offsets = [0, 64], sizes = [4, 64], strides = [1, 1]} : vector<4x192xf32> to vector<4x64xf32>
    %102 = vector.extract_strided_slice %97 {offsets = [0, 128], sizes = [4, 64], strides = [1, 1]} : vector<4x192xf32> to vector<4x64xf32>
    %103 = arith.mulf %101, %79 : vector<4x64xf32>
    %104 = arith.mulf %100, %99 : vector<4x64xf32>
    %105 = arith.addf %103, %104 : vector<4x64xf32>
    %106 = math.tanh %105 : vector<4x64xf32>
    %107 = arith.mulf %102, %106 : vector<4x64xf32>
    %108 = vector.extract_strided_slice %49 {offsets = [2, 0, 0], sizes = [1, 2, 256], strides = [1, 1, 1]} : vector<8x2x512xf32> to vector<1x2x256xf32>
    %109 = vector.shape_cast %108 : vector<1x2x256xf32> to vector<2x256xf32>
    %110 = vector.extract_strided_slice %49 {offsets = [5, 0, 256], sizes = [1, 2, 256], strides = [1, 1, 1]} : vector<8x2x512xf32> to vector<1x2x256xf32>
    %111 = vector.shape_cast %110 : vector<1x2x256xf32> to vector<2x256xf32>
    %112 = tpu.concatenate %109, %111 in 0 : vector<2x256xf32>, vector<2x256xf32> -> vector<4x256xf32>
    %cst_47 = arith.constant dense<0.000000e+00> : vector<4x512xf32>
    %113 = tpu.matmul %107, %50, %cst_47 {dimension_numbers = #tpu.dot_dimension_numbers<[1], [0], [0], [1], [0, 0, 1, 1], [], []>} : vector<4x64xf32>, vector<64x512xf32>, vector<4x512xf32> -> vector<4x512xf32>
    %114 = vector.extract_strided_slice %113 {offsets = [0, 0], sizes = [4, 256], strides = [1, 1]} : vector<4x512xf32> to vector<4x256xf32>
    %115 = vector.extract_strided_slice %113 {offsets = [0, 256], sizes = [4, 256], strides = [1, 1]} : vector<4x512xf32> to vector<4x256xf32>
    %116 = arith.select %53, %114, %115 : vector<4x256xi1>, vector<4x256xf32>
    %117 = arith.addf %112, %116 : vector<4x256xf32>
    %118 = vector.extract_strided_slice %117 {offsets = [0, 0], sizes = [4, 192], strides = [1, 1]} : vector<4x256xf32> to vector<4x192xf32>
    %119 = arith.negf %118 : vector<4x192xf32>
    %120 = math.exp %119 : vector<4x192xf32>
    %cst_48 = arith.constant 1.000000e+00 : f32
    %121 = vector.broadcast %cst_48 : f32 to vector<4x192xf32>
    %122 = arith.addf %121, %120 : vector<4x192xf32>
    %123 = arith.divf %121, %122 : vector<4x192xf32>
    %124 = vector.extract_strided_slice %117 {offsets = [0, 192], sizes = [4, 64], strides = [1, 1]} : vector<4x256xf32> to vector<4x64xf32>
    %125 = math.tanh %124 : vector<4x64xf32>
    %126 = vector.extract_strided_slice %123 {offsets = [0, 0], sizes = [4, 64], strides = [1, 1]} : vector<4x192xf32> to vector<4x64xf32>
    %127 = vector.extract_strided_slice %123 {offsets = [0, 64], sizes = [4, 64], strides = [1, 1]} : vector<4x192xf32> to vector<4x64xf32>
    %128 = vector.extract_strided_slice %123 {offsets = [0, 128], sizes = [4, 64], strides = [1, 1]} : vector<4x192xf32> to vector<4x64xf32>
    %129 = arith.mulf %127, %105 : vector<4x64xf32>
    %130 = arith.mulf %126, %125 : vector<4x64xf32>
    %131 = arith.addf %129, %130 : vector<4x64xf32>
    %132 = math.tanh %131 : vector<4x64xf32>
    %133 = arith.mulf %128, %132 : vector<4x64xf32>
    %134 = vector.extract_strided_slice %49 {offsets = [3, 0, 0], sizes = [1, 2, 256], strides = [1, 1, 1]} : vector<8x2x512xf32> to vector<1x2x256xf32>
    %135 = vector.shape_cast %134 : vector<1x2x256xf32> to vector<2x256xf32>
    %136 = vector.extract_strided_slice %49 {offsets = [4, 0, 256], sizes = [1, 2, 256], strides = [1, 1, 1]} : vector<8x2x512xf32> to vector<1x2x256xf32>
    %137 = vector.shape_cast %136 : vector<1x2x256xf32> to vector<2x256xf32>
    %138 = tpu.concatenate %135, %137 in 0 : vector<2x256xf32>, vector<2x256xf32> -> vector<4x256xf32>
    %cst_49 = arith.constant dense<0.000000e+00> : vector<4x512xf32>
    %139 = tpu.matmul %133, %50, %cst_49 {dimension_numbers = #tpu.dot_dimension_numbers<[1], [0], [0], [1], [0, 0, 1, 1], [], []>} : vector<4x64xf32>, vector<64x512xf32>, vector<4x512xf32> -> vector<4x512xf32>
    %140 = vector.extract_strided_slice %139 {offsets = [0, 0], sizes = [4, 256], strides = [1, 1]} : vector<4x512xf32> to vector<4x256xf32>
    %141 = vector.extract_strided_slice %139 {offsets = [0, 256], sizes = [4, 256], strides = [1, 1]} : vector<4x512xf32> to vector<4x256xf32>
    %142 = arith.select %53, %140, %141 : vector<4x256xi1>, vector<4x256xf32>
    %143 = arith.addf %138, %142 : vector<4x256xf32>
    %144 = vector.extract_strided_slice %143 {offsets = [0, 0], sizes = [4, 192], strides = [1, 1]} : vector<4x256xf32> to vector<4x192xf32>
    %145 = arith.negf %144 : vector<4x192xf32>
    %146 = math.exp %145 : vector<4x192xf32>
    %cst_50 = arith.constant 1.000000e+00 : f32
    %147 = vector.broadcast %cst_50 : f32 to vector<4x192xf32>
    %148 = arith.addf %147, %146 : vector<4x192xf32>
    %149 = arith.divf %147, %148 : vector<4x192xf32>
    %150 = vector.extract_strided_slice %143 {offsets = [0, 192], sizes = [4, 64], strides = [1, 1]} : vector<4x256xf32> to vector<4x64xf32>
    %151 = math.tanh %150 : vector<4x64xf32>
    %152 = vector.extract_strided_slice %149 {offsets = [0, 0], sizes = [4, 64], strides = [1, 1]} : vector<4x192xf32> to vector<4x64xf32>
    %153 = vector.extract_strided_slice %149 {offsets = [0, 64], sizes = [4, 64], strides = [1, 1]} : vector<4x192xf32> to vector<4x64xf32>
    %154 = vector.extract_strided_slice %149 {offsets = [0, 128], sizes = [4, 64], strides = [1, 1]} : vector<4x192xf32> to vector<4x64xf32>
    %155 = arith.mulf %153, %131 : vector<4x64xf32>
    %156 = arith.mulf %152, %151 : vector<4x64xf32>
    %157 = arith.addf %155, %156 : vector<4x64xf32>
    %158 = math.tanh %157 : vector<4x64xf32>
    %159 = arith.mulf %154, %158 : vector<4x64xf32>
    %160 = vector.extract_strided_slice %49 {offsets = [4, 0, 0], sizes = [1, 2, 256], strides = [1, 1, 1]} : vector<8x2x512xf32> to vector<1x2x256xf32>
    %161 = vector.shape_cast %160 : vector<1x2x256xf32> to vector<2x256xf32>
    %162 = vector.extract_strided_slice %49 {offsets = [3, 0, 256], sizes = [1, 2, 256], strides = [1, 1, 1]} : vector<8x2x512xf32> to vector<1x2x256xf32>
    %163 = vector.shape_cast %162 : vector<1x2x256xf32> to vector<2x256xf32>
    %164 = tpu.concatenate %161, %163 in 0 : vector<2x256xf32>, vector<2x256xf32> -> vector<4x256xf32>
    %cst_51 = arith.constant dense<0.000000e+00> : vector<4x512xf32>
    %165 = tpu.matmul %159, %50, %cst_51 {dimension_numbers = #tpu.dot_dimension_numbers<[1], [0], [0], [1], [0, 0, 1, 1], [], []>} : vector<4x64xf32>, vector<64x512xf32>, vector<4x512xf32> -> vector<4x512xf32>
    %166 = vector.extract_strided_slice %165 {offsets = [0, 0], sizes = [4, 256], strides = [1, 1]} : vector<4x512xf32> to vector<4x256xf32>
    %167 = vector.extract_strided_slice %165 {offsets = [0, 256], sizes = [4, 256], strides = [1, 1]} : vector<4x512xf32> to vector<4x256xf32>
    %168 = arith.select %53, %166, %167 : vector<4x256xi1>, vector<4x256xf32>
    %169 = arith.addf %164, %168 : vector<4x256xf32>
    %170 = vector.extract_strided_slice %169 {offsets = [0, 0], sizes = [4, 192], strides = [1, 1]} : vector<4x256xf32> to vector<4x192xf32>
    %171 = arith.negf %170 : vector<4x192xf32>
    %172 = math.exp %171 : vector<4x192xf32>
    %cst_52 = arith.constant 1.000000e+00 : f32
    %173 = vector.broadcast %cst_52 : f32 to vector<4x192xf32>
    %174 = arith.addf %173, %172 : vector<4x192xf32>
    %175 = arith.divf %173, %174 : vector<4x192xf32>
    %176 = vector.extract_strided_slice %169 {offsets = [0, 192], sizes = [4, 64], strides = [1, 1]} : vector<4x256xf32> to vector<4x64xf32>
    %177 = math.tanh %176 : vector<4x64xf32>
    %178 = vector.extract_strided_slice %175 {offsets = [0, 0], sizes = [4, 64], strides = [1, 1]} : vector<4x192xf32> to vector<4x64xf32>
    %179 = vector.extract_strided_slice %175 {offsets = [0, 64], sizes = [4, 64], strides = [1, 1]} : vector<4x192xf32> to vector<4x64xf32>
    %180 = vector.extract_strided_slice %175 {offsets = [0, 128], sizes = [4, 64], strides = [1, 1]} : vector<4x192xf32> to vector<4x64xf32>
    %181 = arith.mulf %179, %157 : vector<4x64xf32>
    %182 = arith.mulf %178, %177 : vector<4x64xf32>
    %183 = arith.addf %181, %182 : vector<4x64xf32>
    %184 = math.tanh %183 : vector<4x64xf32>
    %185 = arith.mulf %180, %184 : vector<4x64xf32>
    %186 = vector.extract_strided_slice %49 {offsets = [5, 0, 0], sizes = [1, 2, 256], strides = [1, 1, 1]} : vector<8x2x512xf32> to vector<1x2x256xf32>
    %187 = vector.shape_cast %186 : vector<1x2x256xf32> to vector<2x256xf32>
    %188 = vector.extract_strided_slice %49 {offsets = [2, 0, 256], sizes = [1, 2, 256], strides = [1, 1, 1]} : vector<8x2x512xf32> to vector<1x2x256xf32>
    %189 = vector.shape_cast %188 : vector<1x2x256xf32> to vector<2x256xf32>
    %190 = tpu.concatenate %187, %189 in 0 : vector<2x256xf32>, vector<2x256xf32> -> vector<4x256xf32>
    %cst_53 = arith.constant dense<0.000000e+00> : vector<4x512xf32>
    %191 = tpu.matmul %185, %50, %cst_53 {dimension_numbers = #tpu.dot_dimension_numbers<[1], [0], [0], [1], [0, 0, 1, 1], [], []>} : vector<4x64xf32>, vector<64x512xf32>, vector<4x512xf32> -> vector<4x512xf32>
    %192 = vector.extract_strided_slice %191 {offsets = [0, 0], sizes = [4, 256], strides = [1, 1]} : vector<4x512xf32> to vector<4x256xf32>
    %193 = vector.extract_strided_slice %191 {offsets = [0, 256], sizes = [4, 256], strides = [1, 1]} : vector<4x512xf32> to vector<4x256xf32>
    %194 = arith.select %53, %192, %193 : vector<4x256xi1>, vector<4x256xf32>
    %195 = arith.addf %190, %194 : vector<4x256xf32>
    %196 = vector.extract_strided_slice %195 {offsets = [0, 0], sizes = [4, 192], strides = [1, 1]} : vector<4x256xf32> to vector<4x192xf32>
    %197 = arith.negf %196 : vector<4x192xf32>
    %198 = math.exp %197 : vector<4x192xf32>
    %cst_54 = arith.constant 1.000000e+00 : f32
    %199 = vector.broadcast %cst_54 : f32 to vector<4x192xf32>
    %200 = arith.addf %199, %198 : vector<4x192xf32>
    %201 = arith.divf %199, %200 : vector<4x192xf32>
    %202 = vector.extract_strided_slice %195 {offsets = [0, 192], sizes = [4, 64], strides = [1, 1]} : vector<4x256xf32> to vector<4x64xf32>
    %203 = math.tanh %202 : vector<4x64xf32>
    %204 = vector.extract_strided_slice %201 {offsets = [0, 0], sizes = [4, 64], strides = [1, 1]} : vector<4x192xf32> to vector<4x64xf32>
    %205 = vector.extract_strided_slice %201 {offsets = [0, 64], sizes = [4, 64], strides = [1, 1]} : vector<4x192xf32> to vector<4x64xf32>
    %206 = vector.extract_strided_slice %201 {offsets = [0, 128], sizes = [4, 64], strides = [1, 1]} : vector<4x192xf32> to vector<4x64xf32>
    %207 = arith.mulf %205, %183 : vector<4x64xf32>
    %208 = arith.mulf %204, %203 : vector<4x64xf32>
    %209 = arith.addf %207, %208 : vector<4x64xf32>
    %210 = math.tanh %209 : vector<4x64xf32>
    %211 = arith.mulf %206, %210 : vector<4x64xf32>
    %212 = vector.extract_strided_slice %49 {offsets = [6, 0, 0], sizes = [1, 2, 256], strides = [1, 1, 1]} : vector<8x2x512xf32> to vector<1x2x256xf32>
    %213 = vector.shape_cast %212 : vector<1x2x256xf32> to vector<2x256xf32>
    %214 = vector.extract_strided_slice %49 {offsets = [1, 0, 256], sizes = [1, 2, 256], strides = [1, 1, 1]} : vector<8x2x512xf32> to vector<1x2x256xf32>
    %215 = vector.shape_cast %214 : vector<1x2x256xf32> to vector<2x256xf32>
    %216 = tpu.concatenate %213, %215 in 0 : vector<2x256xf32>, vector<2x256xf32> -> vector<4x256xf32>
    %cst_55 = arith.constant dense<0.000000e+00> : vector<4x512xf32>
    %217 = tpu.matmul %211, %50, %cst_55 {dimension_numbers = #tpu.dot_dimension_numbers<[1], [0], [0], [1], [0, 0, 1, 1], [], []>} : vector<4x64xf32>, vector<64x512xf32>, vector<4x512xf32> -> vector<4x512xf32>
    %218 = vector.extract_strided_slice %217 {offsets = [0, 0], sizes = [4, 256], strides = [1, 1]} : vector<4x512xf32> to vector<4x256xf32>
    %219 = vector.extract_strided_slice %217 {offsets = [0, 256], sizes = [4, 256], strides = [1, 1]} : vector<4x512xf32> to vector<4x256xf32>
    %220 = arith.select %53, %218, %219 : vector<4x256xi1>, vector<4x256xf32>
    %221 = arith.addf %216, %220 : vector<4x256xf32>
    %222 = vector.extract_strided_slice %221 {offsets = [0, 0], sizes = [4, 192], strides = [1, 1]} : vector<4x256xf32> to vector<4x192xf32>
    %223 = arith.negf %222 : vector<4x192xf32>
    %224 = math.exp %223 : vector<4x192xf32>
    %cst_56 = arith.constant 1.000000e+00 : f32
    %225 = vector.broadcast %cst_56 : f32 to vector<4x192xf32>
    %226 = arith.addf %225, %224 : vector<4x192xf32>
    %227 = arith.divf %225, %226 : vector<4x192xf32>
    %228 = vector.extract_strided_slice %221 {offsets = [0, 192], sizes = [4, 64], strides = [1, 1]} : vector<4x256xf32> to vector<4x64xf32>
    %229 = math.tanh %228 : vector<4x64xf32>
    %230 = vector.extract_strided_slice %227 {offsets = [0, 0], sizes = [4, 64], strides = [1, 1]} : vector<4x192xf32> to vector<4x64xf32>
    %231 = vector.extract_strided_slice %227 {offsets = [0, 64], sizes = [4, 64], strides = [1, 1]} : vector<4x192xf32> to vector<4x64xf32>
    %232 = vector.extract_strided_slice %227 {offsets = [0, 128], sizes = [4, 64], strides = [1, 1]} : vector<4x192xf32> to vector<4x64xf32>
    %233 = arith.mulf %231, %209 : vector<4x64xf32>
    %234 = arith.mulf %230, %229 : vector<4x64xf32>
    %235 = arith.addf %233, %234 : vector<4x64xf32>
    %236 = math.tanh %235 : vector<4x64xf32>
    %237 = arith.mulf %232, %236 : vector<4x64xf32>
    %238 = vector.extract_strided_slice %49 {offsets = [7, 0, 0], sizes = [1, 2, 256], strides = [1, 1, 1]} : vector<8x2x512xf32> to vector<1x2x256xf32>
    %239 = vector.shape_cast %238 : vector<1x2x256xf32> to vector<2x256xf32>
    %240 = vector.extract_strided_slice %49 {offsets = [0, 0, 256], sizes = [1, 2, 256], strides = [1, 1, 1]} : vector<8x2x512xf32> to vector<1x2x256xf32>
    %241 = vector.shape_cast %240 : vector<1x2x256xf32> to vector<2x256xf32>
    %242 = tpu.concatenate %239, %241 in 0 : vector<2x256xf32>, vector<2x256xf32> -> vector<4x256xf32>
    %cst_57 = arith.constant dense<0.000000e+00> : vector<4x512xf32>
    %243 = tpu.matmul %237, %50, %cst_57 {dimension_numbers = #tpu.dot_dimension_numbers<[1], [0], [0], [1], [0, 0, 1, 1], [], []>} : vector<4x64xf32>, vector<64x512xf32>, vector<4x512xf32> -> vector<4x512xf32>
    %244 = vector.extract_strided_slice %243 {offsets = [0, 0], sizes = [4, 256], strides = [1, 1]} : vector<4x512xf32> to vector<4x256xf32>
    %245 = vector.extract_strided_slice %243 {offsets = [0, 256], sizes = [4, 256], strides = [1, 1]} : vector<4x512xf32> to vector<4x256xf32>
    %246 = arith.select %53, %244, %245 : vector<4x256xi1>, vector<4x256xf32>
    %247 = arith.addf %242, %246 : vector<4x256xf32>
    %248 = vector.extract_strided_slice %247 {offsets = [0, 0], sizes = [4, 192], strides = [1, 1]} : vector<4x256xf32> to vector<4x192xf32>
    %249 = arith.negf %248 : vector<4x192xf32>
    %250 = math.exp %249 : vector<4x192xf32>
    %cst_58 = arith.constant 1.000000e+00 : f32
    %251 = vector.broadcast %cst_58 : f32 to vector<4x192xf32>
    %252 = arith.addf %251, %250 : vector<4x192xf32>
    %253 = arith.divf %251, %252 : vector<4x192xf32>
    %254 = vector.extract_strided_slice %247 {offsets = [0, 192], sizes = [4, 64], strides = [1, 1]} : vector<4x256xf32> to vector<4x64xf32>
    %255 = math.tanh %254 : vector<4x64xf32>
    %256 = vector.extract_strided_slice %253 {offsets = [0, 0], sizes = [4, 64], strides = [1, 1]} : vector<4x192xf32> to vector<4x64xf32>
    %257 = vector.extract_strided_slice %253 {offsets = [0, 64], sizes = [4, 64], strides = [1, 1]} : vector<4x192xf32> to vector<4x64xf32>
    %258 = vector.extract_strided_slice %253 {offsets = [0, 128], sizes = [4, 64], strides = [1, 1]} : vector<4x192xf32> to vector<4x64xf32>
    %259 = arith.mulf %257, %235 : vector<4x64xf32>
    %260 = arith.mulf %256, %255 : vector<4x64xf32>
    %261 = arith.addf %259, %260 : vector<4x64xf32>
    %262 = math.tanh %261 : vector<4x64xf32>
    %263 = arith.mulf %258, %262 : vector<4x64xf32>
    %c0_59 = arith.constant 0 : index
    %c0_60 = arith.constant 0 : index
    %264 = vector.load %arg3[%c0_59, %c0_60] : memref<136x4xf32, #tpu.memory_space<vmem>>, vector<64x4xf32>
    %c64 = arith.constant 64 : index
    %c0_61 = arith.constant 0 : index
    %265 = vector.load %arg3[%c64, %c0_61] : memref<136x4xf32, #tpu.memory_space<vmem>>, vector<64x4xf32>
    %c128 = arith.constant 128 : index
    %c0_62 = arith.constant 0 : index
    %266 = vector.load %arg3[%c128, %c0_62] : memref<136x4xf32, #tpu.memory_space<vmem>>, vector<1x4xf32>
    %267 = vector.extract_strided_slice %263 {offsets = [0, 0], sizes = [2, 64], strides = [1, 1]} : vector<4x64xf32> to vector<2x64xf32>
    %cst_63 = arith.constant dense<0.000000e+00> : vector<2x4xf32>
    %268 = tpu.matmul %267, %264, %cst_63 {dimension_numbers = #tpu.dot_dimension_numbers<[1], [0], [0], [1], [0, 0, 1, 1], [], []>} : vector<2x64xf32>, vector<64x4xf32>, vector<2x4xf32> -> vector<2x4xf32>
    %269 = vector.extract_strided_slice %263 {offsets = [2, 0], sizes = [2, 64], strides = [1, 1]} : vector<4x64xf32> to vector<2x64xf32>
    %cst_64 = arith.constant dense<0.000000e+00> : vector<2x4xf32>
    %270 = tpu.matmul %269, %265, %cst_64 {dimension_numbers = #tpu.dot_dimension_numbers<[1], [0], [0], [1], [0, 0, 1, 1], [], []>} : vector<2x64xf32>, vector<64x4xf32>, vector<2x4xf32> -> vector<2x4xf32>
    %271 = arith.addf %268, %270 : vector<2x4xf32>
    %272 = vector.broadcast %266 : vector<1x4xf32> to vector<2x4xf32>
    %273 = arith.addf %271, %272 : vector<2x4xf32>
    %cst_65 = arith.constant dense<0xFF800000> : vector<2xf32>
    %274 = vector.multi_reduction <maximumf>, %273, %cst_65 [1] : vector<2x4xf32> to vector<2xf32>
    %275 = vector.shape_cast %274 : vector<2xf32> to vector<2x1xf32>
    %276 = vector.broadcast %275 : vector<2x1xf32> to vector<2x4xf32>
    %277 = arith.subf %273, %276 : vector<2x4xf32>
    %278 = math.exp %277 : vector<2x4xf32>
    %cst_66 = arith.constant dense<0.000000e+00> : vector<2xf32>
    %279 = vector.multi_reduction <add>, %278, %cst_66 [1] : vector<2x4xf32> to vector<2xf32>
    %280 = vector.shape_cast %279 : vector<2xf32> to vector<2x1xf32>
    %281 = vector.broadcast %280 : vector<2x1xf32> to vector<2x4xf32>
    %282 = arith.divf %278, %281 : vector<2x4xf32>
    %c0_67 = arith.constant 0 : index
    %c0_68 = arith.constant 0 : index
    %283 = vector.load %arg4[%c0_67, %c0_68] : memref<2x4xf32, #tpu.memory_space<vmem>>, vector<2x4xf32>
    tpu.vector_store %arg4[%c0_67, %c0_68], %282 {strides = array<i32>} : memref<2x4xf32, #tpu.memory_space<vmem>>, vector<2x4xf32>,
    return
  }
}

</mosaic_0001>

<llo_original>
// kernel: text_model_forward.1
$region0: #{text_model_forward.1}
  #allocation0 [shape = 'u32[]', space=smem, size = 0x4, offset = 0x4, fixed_abs, tag = 'smem constant byte address 0x4 - core index']
  #allocation1 [shape = 'u32[144,128]{1,0:T(1,128)}', space=vmem, size = 0x12000, scoped, tag = 'internal scratch']
  %s0 = inlined_call_operand.vmem [shape: s32[2,8], index: 0, kind: input, shape index: {}]
  %s1 = inlined_call_operand.hbm [shape: f32[100,512], index: 1, kind: input, shape index: {}]
  %s2 = inlined_call_operand.hbm [shape: f32[64,512], index: 2, kind: input, shape index: {}]
  %s3 = inlined_call_operand.vmem [shape: f32[136,4], index: 3, kind: input, shape index: {}]
  %s4 = inlined_call_operand.hbm [shape: f32[2,4], index: 4, kind: output, shape index: {}]
  %s5 = sld [smem:[#allocation0]]
  $region38: #{text_model_forward.1} parent=0
    _
  %s7 = ssub.s32 1, %s5
  %s8 = scalar_select 0, %s7, %s5
  $region1: #{text_model_forward.1} parent=0
    #allocation2 [shape = 'u8[1024]{0}', space=smem, size = 0x400, scoped, tag = 'input window, operand 0, single buffered']
    #allocation3 [shape = 's32[1]{0}', space=sflag, size = 0x4, scoped, tag = 'scoped memory for text_model_forward.1']
    #allocation4 [shape = 's32[1]{0}', space=sflag, size = 0x4, scoped, tag = 'scoped memory for text_model_forward.1']
    #allocation5 [shape = 's32[1]{0}', space=sflag, size = 0x4, scoped, tag = 'scoped memory for text_model_forward.1']
    #allocation6 [shape = 'u8[212992]{0}', space=vmem, size = 0x34000, scoped, tag = 'input window, operand 1, single buffered']
    #allocation7 [shape = 'u8[131072]{0}', space=vmem, size = 0x20000, scoped, tag = 'input window, operand 2, single buffered']
    #allocation8 [shape = 's32[1]{0}', space=sflag, size = 0x4, scoped, tag = 'scoped memory for text_model_forward.1']
    #allocation9 [shape = 'u8[1024]{0}', space=vmem, size = 0x400, scoped, tag = 'output window, operand 0, single buffered']
    %9 = vsyncpa [#allocation5], 0
    %10 = vsyncpa [#allocation3], 0
    %11 = vsyncpa [#allocation8], 0
    %12 = vsyncpa [#allocation4], 0
    // Predicated region
    $region2: #{text_model_forward.1} parent=1 // pred_check
      _
    $region3: #{text_model_forward.1} parent=1 // pred_check_branch
      %14 = sbr.rel (0) target = $region5
    $region4: #{text_model_forward.1} parent=1 // pred_region
      %s16 = ssub.s32 32, 32
      %17 = vsyncadd [#allocation5], %s16
      %s19 = sshll.u32 %s0, 4
      %s20 = int_to_ptr.vmem [resolvable:$true] %s19
      %22 = dma.vmem_to_smem %s20, 32, [#allocation2], [#allocation5]
    $region5: #{text_model_forward.1} parent=1 // pred_fallthru
      _
    // Predicated region
    $region6: #{text_model_forward.1} parent=1 // pred_check
      _
    $region7: #{text_model_forward.1} parent=1 // pred_check_branch
      %24 = sbr.rel (0) target = $region9
    $region8: #{text_model_forward.1} parent=1 // pred_region
      %s26 = ssub.s32 6656, 6656
      %27 = vsyncadd [#allocation3], %s26
      %s28 = sshll.u32 [#allocation6], 4
      %s29 = int_to_ptr.vmem [resolvable:$true] %s28
      %34 = dma.hbm_to_vmem [thread:$0]  %s1, 6656, %s29, [#allocation3], 512, 512, 32
    $region9: #{text_model_forward.1} parent=1 // pred_fallthru
      _
    // Predicated region
    $region10: #{text_model_forward.1} parent=1 // pred_check
      _
    $region11: #{text_model_forward.1} parent=1 // pred_check_branch
      %36 = sbr.rel (0) target = $region13
    $region12: #{text_model_forward.1} parent=1 // pred_region
      %s38 = ssub.s32 4096, 4096
      %39 = vsyncadd [#allocation8], %s38
      %s40 = sshll.u32 [#allocation7], 4
      %s41 = int_to_ptr.vmem [resolvable:$true] %s40
      %46 = dma.hbm_to_vmem [thread:$0]  %s2, 4096, %s41, [#allocation8], 512, 512, 32
    $region13: #{text_model_forward.1} parent=1 // pred_fallthru
      _
    // Predicated region
    $region14: #{text_model_forward.1} parent=1 // pred_check
      _
    $region15: #{text_model_forward.1} parent=1 // pred_check_branch
      %48 = sbr.rel (0) target = $region17
    $region16: #{text_model_forward.1} parent=1 // pred_region
      _
    $region17: #{text_model_forward.1} parent=1 // pred_fallthru
      _
    // Predicated region
    $region18: #{text_model_forward.1} parent=1 // pred_check
      _
    $region19: #{text_model_forward.1} parent=1 // pred_check_branch
      %50 = sbr.rel (0) target = $region21
    $region20: #{text_model_forward.1} parent=1 // pred_region
      %51 = dma.done [#allocation5], 32
    $region21: #{text_model_forward.1} parent=1 // pred_fallthru
      _
    // Predicated region
    $region22: #{text_model_forward.1} parent=1 // pred_check
      _
    $region23: #{text_model_forward.1} parent=1 // pred_check_branch
      %53 = sbr.rel (0) target = $region25
    $region24: #{text_model_forward.1} parent=1 // pred_region
      %54 = dma.done [#allocation3], 6656
    $region25: #{text_model_forward.1} parent=1 // pred_fallthru
      _
    // Predicated region
    $region26: #{text_model_forward.1} parent=1 // pred_check
      _
    $region27: #{text_model_forward.1} parent=1 // pred_check_branch
      %56 = sbr.rel (0) target = $region29
    $region28: #{text_model_forward.1} parent=1 // pred_region
      %57 = dma.done [#allocation8], 4096
    $region29: #{text_model_forward.1} parent=1 // pred_fallthru
      _
    %58 = sfence
    %s59 = sld [smem:[#allocation2]]
    %s60 = sshra.s32 %s59, 3
    %s61 = sand.u32 %s59, 7
    %s62 = sshra.s32 %s59, 3
    %s63 = sand.u32 %s59, 7
    %s64 = smul.u32 %s60, 4
    %s65 = smul.u32 %s64, 8
    %s66 = sadd.s32 %s65, %s63
    %s67 = scalar_lea.vmem [#allocation6], %s66
    %v68 = vld [vmem:[%s67] ss:$8 sm:$0xf]
    %s69 = sld [smem:[#allocation2 + $0x80]]
    %s70 = sshra.s32 %s69, 3
    %s71 = sand.u32 %s69, 7
    %s72 = sshra.s32 %s69, 3
    %s73 = sand.u32 %s69, 7
    %s74 = smul.u32 %s70, 4
    %s75 = smul.u32 %s74, 8
    %s76 = sadd.s32 %s75, %s73
    %s77 = scalar_lea.vmem [#allocation6], %s76
    %v78 = vld [vmem:[%s77] ss:$8 sm:$0xf]
    %s79 = sld [smem:[#allocation2 + $0x1]]
    %s80 = sshra.s32 %s79, 3
    %s81 = sand.u32 %s79, 7
    %s82 = sshra.s32 %s79, 3
    %s83 = sand.u32 %s79, 7
    %s84 = smul.u32 %s80, 4
    %s85 = smul.u32 %s84, 8
    %s86 = sadd.s32 %s85, %s83
    %s87 = scalar_lea.vmem [#allocation6], %s86
    %v88 = vld [vmem:[%s87] ss:$8 sm:$0xf]
    %s89 = sld [smem:[#allocation2 + $0x81]]
    %s90 = sshra.s32 %s89, 3
    %s91 = sand.u32 %s89, 7
    %s92 = sshra.s32 %s89, 3
    %s93 = sand.u32 %s89, 7
    %s94 = smul.u32 %s90, 4
    %s95 = smul.u32 %s94, 8
    %s96 = sadd.s32 %s95, %s93
    %s97 = scalar_lea.vmem [#allocation6], %s96
    %v98 = vld [vmem:[%s97] ss:$8 sm:$0xf]
    %s99 = sld [smem:[#allocation2 + $0x2]]
    %s100 = sshra.s32 %s99, 3
    %s101 = sand.u32 %s99, 7
    %s102 = sshra.s32 %s99, 3
    %s103 = sand.u32 %s99, 7
    %s104 = smul.u32 %s100, 4
    %s105 = smul.u32 %s104, 8
    %s106 = sadd.s32 %s105, %s103
    %s107 = scalar_lea.vmem [#allocation6], %s106
    %v108 = vld [vmem:[%s107] ss:$8 sm:$0xf]
    %s109 = sld [smem:[#allocation2 + $0x82]]
    %s110 = sshra.s32 %s109, 3
    %s111 = sand.u32 %s109, 7
    %s112 = sshra.s32 %s109, 3
    %s113 = sand.u32 %s109, 7
    %s114 = smul.u32 %s110, 4
    %s115 = smul.u32 %s114, 8
    %s116 = sadd.s32 %s115, %s113
    %s117 = scalar_lea.vmem [#allocation6], %s116
    %v118 = vld [vmem:[%s117] ss:$8 sm:$0xf]
    %s119 = sld [smem:[#allocation2 + $0x3]]
    %s120 = sshra.s32 %s119, 3
    %s121 = sand.u32 %s119, 7
    %s122 = sshra.s32 %s119, 3
    %s123 = sand.u32 %s119, 7
    %s124 = smul.u32 %s120, 4
    %s125 = smul.u32 %s124, 8
    %s126 = sadd.s32 %s125, %s123
    %s127 = scalar_lea.vmem [#allocation6], %s126
    %v128 = vld [vmem:[%s127] ss:$8 sm:$0xf]
    %s129 = sld [smem:[#allocation2 + $0x83]]
    %s130 = sshra.s32 %s129, 3
    %s131 = sand.u32 %s129, 7
    %s132 = sshra.s32 %s129, 3
    %s133 = sand.u32 %s129, 7
    %s134 = smul.u32 %s130, 4
    %s135 = smul.u32 %s134, 8
    %s136 = sadd.s32 %s135, %s133
    %s137 = scalar_lea.vmem [#allocation6], %s136
    %v138 = vld [vmem:[%s137] ss:$8 sm:$0xf]
    %s139 = sld [smem:[#allocation2 + $0x4]]
    %s140 = sshra.s32 %s139, 3
    %s141 = sand.u32 %s139, 7
    %s142 = sshra.s32 %s139, 3
    %s143 = sand.u32 %s139, 7
    %s144 = smul.u32 %s140, 4
    %s145 = smul.u32 %s144, 8
    %s146 = sadd.s32 %s145, %s143
    %s147 = scalar_lea.vmem [#allocation6], %s146
    %v148 = vld [vmem:[%s147] ss:$8 sm:$0xf]
    %s149 = sld [smem:[#allocation2 + $0x84]]
    %s150 = sshra.s32 %s149, 3
    %s151 = sand.u32 %s149, 7
    %s152 = sshra.s32 %s149, 3
    %s153 = sand.u32 %s149, 7
    %s154 = smul.u32 %s150, 4
    %s155 = smul.u32 %s154, 8
    %s156 = sadd.s32 %s155, %s153
    %s157 = scalar_lea.vmem [#allocation6], %s156
    %v158 = vld [vmem:[%s157] ss:$8 sm:$0xf]
    %s159 = sld [smem:[#allocation2 + $0x5]]
    %s160 = sshra.s32 %s159, 3
    %s161 = sand.u32 %s159, 7
    %s162 = sshra.s32 %s159, 3
    %s163 = sand.u32 %s159, 7
    %s164 = smul.u32 %s160, 4
    %s165 = smul.u32 %s164, 8
    %s166 = sadd.s32 %s165, %s163
    %s167 = scalar_lea.vmem [#allocation6], %s166
    %v168 = vld [vmem:[%s167] ss:$8 sm:$0xf]
    %s169 = sld [smem:[#allocation2 + $0x85]]
    %s170 = sshra.s32 %s169, 3
    %s171 = sand.u32 %s169, 7
    %s172 = sshra.s32 %s169, 3
    %s173 = sand.u32 %s169, 7
    %s174 = smul.u32 %s170, 4
    %s175 = smul.u32 %s174, 8
    %s176 = sadd.s32 %s175, %s173
    %s177 = scalar_lea.vmem [#allocation6], %s176
    %v178 = vld [vmem:[%s177] ss:$8 sm:$0xf]
    %s179 = sld [smem:[#allocation2 + $0x6]]
    %s180 = sshra.s32 %s179, 3
    %s181 = sand.u32 %s179, 7
    %s182 = sshra.s32 %s179, 3
    %s183 = sand.u32 %s179, 7
    %s184 = smul.u32 %s180, 4
    %s185 = smul.u32 %s184, 8
    %s186 = sadd.s32 %s185, %s183
    %s187 = scalar_lea.vmem [#allocation6], %s186
    %v188 = vld [vmem:[%s187] ss:$8 sm:$0xf]
    %s189 = sld [smem:[#allocation2 + $0x86]]
    %s190 = sshra.s32 %s189, 3
    %s191 = sand.u32 %s189, 7
    %s192 = sshra.s32 %s189, 3
    %s193 = sand.u32 %s189, 7
    %s194 = smul.u32 %s190, 4
    %s195 = smul.u32 %s194, 8
    %s196 = sadd.s32 %s195, %s193
    %s197 = scalar_lea.vmem [#allocation6], %s196
    %v198 = vld [vmem:[%s197] ss:$8 sm:$0xf]
    %s199 = sld [smem:[#allocation2 + $0x7]]
    %s200 = sshra.s32 %s199, 3
    %s201 = sand.u32 %s199, 7
    %s202 = sshra.s32 %s199, 3
    %s203 = sand.u32 %s199, 7
    %s204 = smul.u32 %s200, 4
    %s205 = smul.u32 %s204, 8
    %s206 = sadd.s32 %s205, %s203
    %s207 = scalar_lea.vmem [#allocation6], %s206
    %v208 = vld [vmem:[%s207] ss:$8 sm:$0xf]
    %s209 = sld [smem:[#allocation2 + $0x87]]
    %s210 = sshra.s32 %s209, 3
    %s211 = sand.u32 %s209, 7
    %s212 = sshra.s32 %s209, 3
    %s213 = sand.u32 %s209, 7
    %s214 = smul.u32 %s210, 4
    %s215 = smul.u32 %s214, 8
    %s216 = sadd.s32 %s215, %s213
    %s217 = scalar_lea.vmem [#allocation6], %s216
    %v218 = vld [vmem:[%s217] ss:$8 sm:$0xf]
    %v220 = vlaneseq
    %v221 = vshrl.u32 %v220, 7
    %v222 = vsub.s32 0, %v221
    %v223 = vrot.slane %v68, %v222
    %v224 = vlaneseq
    %v225 = vshrl.u32 %v224, 7
    %v226 = vsub.s32 1, %v225
    %v227 = vrot.slane %v68, %v226
    %v228 = vlaneseq
    %v229 = vshrl.u32 %v228, 7
    %v230 = vsub.s32 2, %v229
    %v231 = vrot.slane %v68, %v230
    %v232 = vlaneseq
    %v233 = vshrl.u32 %v232, 7
    %v234 = vsub.s32 3, %v233
    %v235 = vrot.slane %v68, %v234
    %v241 = vlaneseq
    %v242 = vshrl.u32 %v241, 7
    %v243 = vsub.s32 0, %v242
    %v244 = vrot.slane %v78, %v243
    %v245 = vlaneseq
    %v246 = vshrl.u32 %v245, 7
    %v247 = vsub.s32 1, %v246
    %v248 = vrot.slane %v78, %v247
    %v249 = vlaneseq
    %v250 = vshrl.u32 %v249, 7
    %v251 = vsub.s32 2, %v250
    %v252 = vrot.slane %v78, %v251
    %v253 = vlaneseq
    %v254 = vshrl.u32 %v253, 7
    %v255 = vsub.s32 3, %v254
    %v256 = vrot.slane %v78, %v255
    %v262 = vlaneseq
    %v263 = vshrl.u32 %v262, 7
    %v264 = vsub.s32 0, %v263
    %v265 = vrot.slane %v88, %v264
    %v266 = vlaneseq
    %v267 = vshrl.u32 %v266, 7
    %v268 = vsub.s32 1, %v267
    %v269 = vrot.slane %v88, %v268
    %v270 = vlaneseq
    %v271 = vshrl.u32 %v270, 7
    %v272 = vsub.s32 2, %v271
    %v273 = vrot.slane %v88, %v272
    %v274 = vlaneseq
    %v275 = vshrl.u32 %v274, 7
    %v276 = vsub.s32 3, %v275
    %v277 = vrot.slane %v88, %v276
    %v283 = vlaneseq
    %v284 = vshrl.u32 %v283, 7
    %v285 = vsub.s32 0, %v284
    %v286 = vrot.slane %v98, %v285
    %v287 = vlaneseq
    %v288 = vshrl.u32 %v287, 7
    %v289 = vsub.s32 1, %v288
    %v290 = vrot.slane %v98, %v289
    %v291 = vlaneseq
    %v292 = vshrl.u32 %v291, 7
    %v293 = vsub.s32 2, %v292
    %v294 = vrot.slane %v98, %v293
    %v295 = vlaneseq
    %v296 = vshrl.u32 %v295, 7
    %v297 = vsub.s32 3, %v296
    %v298 = vrot.slane %v98, %v297
    %v304 = vlaneseq
    %v305 = vshrl.u32 %v304, 7
    %v306 = vsub.s32 0, %v305
    %v307 = vrot.slane %v108, %v306
    %v308 = vlaneseq
    %v309 = vshrl.u32 %v308, 7
    %v310 = vsub.s32 1, %v309
    %v311 = vrot.slane %v108, %v310
    %v312 = vlaneseq
    %v313 = vshrl.u32 %v312, 7
    %v314 = vsub.s32 2, %v313
    %v315 = vrot.slane %v108, %v314
    %v316 = vlaneseq
    %v317 = vshrl.u32 %v316, 7
    %v318 = vsub.s32 3, %v317
    %v319 = vrot.slane %v108, %v318
    %v325 = vlaneseq
    %v326 = vshrl.u32 %v325, 7
    %v327 = vsub.s32 0, %v326
    %v328 = vrot.slane %v118, %v327
    %v329 = vlaneseq
    %v330 = vshrl.u32 %v329, 7
    %v331 = vsub.s32 1, %v330
    %v332 = vrot.slane %v118, %v331
    %v333 = vlaneseq
    %v334 = vshrl.u32 %v333, 7
    %v335 = vsub.s32 2, %v334
    %v336 = vrot.slane %v118, %v335
    %v337 = vlaneseq
    %v338 = vshrl.u32 %v337, 7
    %v339 = vsub.s32 3, %v338
    %v340 = vrot.slane %v118, %v339
    %v346 = vlaneseq
    %v347 = vshrl.u32 %v346, 7
    %v348 = vsub.s32 0, %v347
    %v349 = vrot.slane %v128, %v348
    %v350 = vlaneseq
    %v351 = vshrl.u32 %v350, 7
    %v352 = vsub.s32 1, %v351
    %v353 = vrot.slane %v128, %v352
    %v354 = vlaneseq
    %v355 = vshrl.u32 %v354, 7
    %v356 = vsub.s32 2, %v355
    %v357 = vrot.slane %v128, %v356
    %v358 = vlaneseq
    %v359 = vshrl.u32 %v358, 7
    %v360 = vsub.s32 3, %v359
    %v361 = vrot.slane %v128, %v360
    %v367 = vlaneseq
    %v368 = vshrl.u32 %v367, 7
    %v369 = vsub.s32 0, %v368
    %v370 = vrot.slane %v138, %v369
    %v371 = vlaneseq
    %v372 = vshrl.u32 %v371, 7
    %v373 = vsub.s32 1, %v372
    %v374 = vrot.slane %v138, %v373
    %v375 = vlaneseq
    %v376 = vshrl.u32 %v375, 7
    %v377 = vsub.s32 2, %v376
    %v378 = vrot.slane %v138, %v377
    %v379 = vlaneseq
    %v380 = vshrl.u32 %v379, 7
    %v381 = vsub.s32 3, %v380
    %v382 = vrot.slane %v138, %v381
    %v388 = vlaneseq
    %v389 = vshrl.u32 %v388, 7
    %v390 = vsub.s32 0, %v389
    %v391 = vrot.slane %v148, %v390
    %v392 = vlaneseq
    %v393 = vshrl.u32 %v392, 7
    %v394 = vsub.s32 1, %v393
    %v395 = vrot.slane %v148, %v394
    %v396 = vlaneseq
    %v397 = vshrl.u32 %v396, 7
    %v398 = vsub.s32 2, %v397
    %v399 = vrot.slane %v148, %v398
    %v400 = vlaneseq
    %v401 = vshrl.u32 %v400, 7
    %v402 = vsub.s32 3, %v401
    %v403 = vrot.slane %v148, %v402
    %v409 = vlaneseq
    %v410 = vshrl.u32 %v409, 7
    %v411 = vsub.s32 0, %v410
    %v412 = vrot.slane %v158, %v411
    %v413 = vlaneseq
    %v414 = vshrl.u32 %v413, 7
    %v415 = vsub.s32 1, %v414
    %v416 = vrot.slane %v158, %v415
    %v417 = vlaneseq
    %v418 = vshrl.u32 %v417, 7
    %v419 = vsub.s32 2, %v418
    %v420 = vrot.slane %v158, %v419
    %v421 = vlaneseq
    %v422 = vshrl.u32 %v421, 7
    %v423 = vsub.s32 3, %v422
    %v424 = vrot.slane %v158, %v423
    %v430 = vlaneseq
    %v431 = vshrl.u32 %v430, 7
    %v432 = vsub.s32 0, %v431
    %v433 = vrot.slane %v168, %v432
    %v434 = vlaneseq
    %v435 = vshrl.u32 %v434, 7
    %v436 = vsub.s32 1, %v435
    %v437 = vrot.slane %v168, %v436
    %v438 = vlaneseq
    %v439 = vshrl.u32 %v438, 7
    %v440 = vsub.s32 2, %v439
    %v441 = vrot.slane %v168, %v440
    %v442 = vlaneseq
    %v443 = vshrl.u32 %v442, 7
    %v444 = vsub.s32 3, %v443
    %v445 = vrot.slane %v168, %v444
    %v451 = vlaneseq
    %v452 = vshrl.u32 %v451, 7
    %v453 = vsub.s32 0, %v452
    %v454 = vrot.slane %v178, %v453
    %v455 = vlaneseq
    %v456 = vshrl.u32 %v455, 7
    %v457 = vsub.s32 1, %v456
    %v458 = vrot.slane %v178, %v457
    %v459 = vlaneseq
    %v460 = vshrl.u32 %v459, 7
    %v461 = vsub.s32 2, %v460
    %v462 = vrot.slane %v178, %v461
    %v463 = vlaneseq
    %v464 = vshrl.u32 %v463, 7
    %v465 = vsub.s32 3, %v464
    %v466 = vrot.slane %v178, %v465
    %v472 = vlaneseq
    %v473 = vshrl.u32 %v472, 7
    %v474 = vsub.s32 0, %v473
    %v475 = vrot.slane %v188, %v474
    %v476 = vlaneseq
    %v477 = vshrl.u32 %v476, 7
    %v478 = vsub.s32 1, %v477
    %v479 = vrot.slane %v188, %v478
    %v480 = vlaneseq
    %v481 = vshrl.u32 %v480, 7
    %v482 = vsub.s32 2, %v481
    %v483 = vrot.slane %v188, %v482
    %v484 = vlaneseq
    %v485 = vshrl.u32 %v484, 7
    %v486 = vsub.s32 3, %v485
    %v487 = vrot.slane %v188, %v486
    %v493 = vlaneseq
    %v494 = vshrl.u32 %v493, 7
    %v495 = vsub.s32 0, %v494
    %v496 = vrot.slane %v198, %v495
    %v497 = vlaneseq
    %v498 = vshrl.u32 %v497, 7
    %v499 = vsub.s32 1, %v498
    %v500 = vrot.slane %v198, %v499
    %v501 = vlaneseq
    %v502 = vshrl.u32 %v501, 7
    %v503 = vsub.s32 2, %v502
    %v504 = vrot.slane %v198, %v503
    %v505 = vlaneseq
    %v506 = vshrl.u32 %v505, 7
    %v507 = vsub.s32 3, %v506
    %v508 = vrot.slane %v198, %v507
    %v514 = vlaneseq
    %v515 = vshrl.u32 %v514, 7
    %v516 = vsub.s32 0, %v515
    %v517 = vrot.slane %v208, %v516
    %v518 = vlaneseq
    %v519 = vshrl.u32 %v518, 7
    %v520 = vsub.s32 1, %v519
    %v521 = vrot.slane %v208, %v520
    %v522 = vlaneseq
    %v523 = vshrl.u32 %v522, 7
    %v524 = vsub.s32 2, %v523
    %v525 = vrot.slane %v208, %v524
    %v526 = vlaneseq
    %v527 = vshrl.u32 %v526, 7
    %v528 = vsub.s32 3, %v527
    %v529 = vrot.slane %v208, %v528
    %v535 = vlaneseq
    %v536 = vshrl.u32 %v535, 7
    %v537 = vsub.s32 0, %v536
    %v538 = vrot.slane %v218, %v537
    %v539 = vlaneseq
    %v540 = vshrl.u32 %v539, 7
    %v541 = vsub.s32 1, %v540
    %v542 = vrot.slane %v218, %v541
    %v543 = vlaneseq
    %v544 = vshrl.u32 %v543, 7
    %v545 = vsub.s32 2, %v544
    %v546 = vrot.slane %v218, %v545
    %v547 = vlaneseq
    %v548 = vshrl.u32 %v547, 7
    %v549 = vsub.s32 3, %v548
    %v550 = vrot.slane %v218, %v549
    %vm555 = vcmask 1040384
    %v556 = vsel %vm555, %v223, %v244
    %v557 = vsel %vm555, %v227, %v248
    %v558 = vsel %vm555, %v231, %v252
    %v559 = vsel %vm555, %v235, %v256
    %vm560 = vcmask 1041408
    %v561 = vsel %vm560, %v556, %v265
    %v562 = vsel %vm560, %v557, %v269
    %v563 = vsel %vm560, %v558, %v273
    %v564 = vsel %vm560, %v559, %v277
    %vm565 = vcmask 1042432
    %v566 = vsel %vm565, %v561, %v286
    %v567 = vsel %vm565, %v562, %v290
    %v568 = vsel %vm565, %v563, %v294
    %v569 = vsel %vm565, %v564, %v298
    %vm570 = vcmask 1043456
    %v571 = vsel %vm570, %v566, %v307
    %v572 = vsel %vm570, %v567, %v311
    %v573 = vsel %vm570, %v568, %v315
    %v574 = vsel %vm570, %v569, %v319
    %vm575 = vcmask 1044480
    %v576 = vsel %vm575, %v571, %v328
    %v577 = vsel %vm575, %v572, %v332
    %v578 = vsel %vm575, %v573, %v336
    %v579 = vsel %vm575, %v574, %v340
    %vm580 = vcmask 1045504
    %v581 = vsel %vm580, %v576, %v349
    %v582 = vsel %vm580, %v577, %v353
    %v583 = vsel %vm580, %v578, %v357
    %v584 = vsel %vm580, %v579, %v361
    %vm585 = vcmask 1046528
    %v586 = vsel %vm585, %v581, %v370
    %v587 = vsel %vm585, %v582, %v374
    %v588 = vsel %vm585, %v583, %v378
    %v589 = vsel %vm585, %v584, %v382
    %v590 = vsel %vm555, %v391, %v412
    %v591 = vsel %vm555, %v395, %v416
    %v592 = vsel %vm555, %v399, %v420
    %v593 = vsel %vm555, %v403, %v424
    %v594 = vsel %vm560, %v590, %v433
    %v595 = vsel %vm560, %v591, %v437
    %v596 = vsel %vm560, %v592, %v441
    %v597 = vsel %vm560, %v593, %v445
    %v598 = vsel %vm565, %v594, %v454
    %v599 = vsel %vm565, %v595, %v458
    %v600 = vsel %vm565, %v596, %v462
    %v601 = vsel %vm565, %v597, %v466
    %v602 = vsel %vm570, %v598, %v475
    %v603 = vsel %vm570, %v599, %v479
    %v604 = vsel %vm570, %v600, %v483
    %v605 = vsel %vm570, %v601, %v487
    %v606 = vsel %vm575, %v602, %v496
    %v607 = vsel %vm575, %v603, %v500
    %v608 = vsel %vm575, %v604, %v504
    %v609 = vsel %vm575, %v605, %v508
    %v610 = vsel %vm580, %v606, %v517
    %v611 = vsel %vm580, %v607, %v521
    %v612 = vsel %vm580, %v608, %v525
    %v613 = vsel %vm580, %v609, %v529
    %v614 = vsel %vm585, %v610, %v538
    %v615 = vsel %vm585, %v611, %v542
    %v616 = vsel %vm585, %v612, %v546
    %v617 = vsel %vm585, %v613, %v550
    %v626 = vcombine.low %v586, %v587
    %v627 = vcombine.high %v586, %v587
    %v628 = vcombine.low %v588, %v589
    %v629 = vcombine.high %v588, %v589
    %v631 = vunpack.c.l.s4 1983009808
    %v632 = vunpack.c.0.s8 %v631
    %v633 = vlaneseq
    %v634 = vshrl.u32 %v633, 7
    %v635 = vsub.s32 %v632, %v634
    %v636 = vrot.slane %v626, %v635
    %v638 = vunpack.c.l.s4 1983009808
    %v639 = vunpack.c.0.s8 %v638
    %v640 = vlaneseq
    %v641 = vshrl.u32 %v640, 7
    %v642 = vsub.s32 %v639, %v641
    %v643 = vrot.slane %v627, %v642
    %v645 = vunpack.c.l.s4 1983009808
    %v646 = vunpack.c.0.s8 %v645
    %v647 = vlaneseq
    %v648 = vshrl.u32 %v647, 7
    %v649 = vsub.s32 %v646, %v648
    %v650 = vrot.slane %v628, %v649
    %v652 = vunpack.c.l.s4 1983009808
    %v653 = vunpack.c.0.s8 %v652
    %v654 = vlaneseq
    %v655 = vshrl.u32 %v654, 7
    %v656 = vsub.s32 %v653, %v655
    %v657 = vrot.slane %v629, %v656
    %v658 = vcombine.low %v636, %v650
    %v659 = vcombine.high %v636, %v650
    %v660 = vcombine.low %v643, %v657
    %v661 = vcombine.high %v643, %v657
    %v662 = vcombine.low %v614, %v615
    %v663 = vcombine.high %v614, %v615
    %v664 = vcombine.low %v616, %v617
    %v665 = vcombine.high %v616, %v617
    %v667 = vunpack.c.l.s4 1983009808
    %v668 = vunpack.c.0.s8 %v667
    %v669 = vlaneseq
    %v670 = vshrl.u32 %v669, 7
    %v671 = vsub.s32 %v668, %v670
    %v672 = vrot.slane %v662, %v671
    %v674 = vunpack.c.l.s4 1983009808
    %v675 = vunpack.c.0.s8 %v674
    %v676 = vlaneseq
    %v677 = vshrl.u32 %v676, 7
    %v678 = vsub.s32 %v675, %v677
    %v679 = vrot.slane %v663, %v678
    %v681 = vunpack.c.l.s4 1983009808
    %v682 = vunpack.c.0.s8 %v681
    %v683 = vlaneseq
    %v684 = vshrl.u32 %v683, 7
    %v685 = vsub.s32 %v682, %v684
    %v686 = vrot.slane %v664, %v685
    %v688 = vunpack.c.l.s4 1983009808
    %v689 = vunpack.c.0.s8 %v688
    %v690 = vlaneseq
    %v691 = vshrl.u32 %v690, 7
    %v692 = vsub.s32 %v689, %v691
    %v693 = vrot.slane %v665, %v692
    %v694 = vcombine.low %v672, %v686
    %v695 = vcombine.high %v672, %v686
    %v696 = vcombine.low %v679, %v693
    %v697 = vcombine.high %v679, %v693
    %v698 = vld [vmem:[#allocation7] sm:$0xff]
    %v699 = vld [vmem:[#allocation7 + $0x8] sm:$0xff]
    %v700 = vld [vmem:[#allocation7 + $0x10] sm:$0xff]
    %v701 = vld [vmem:[#allocation7 + $0x18] sm:$0xff]
    %v702 = vld [vmem:[#allocation7 + $0x20] sm:$0xff]
    %v703 = vld [vmem:[#allocation7 + $0x28] sm:$0xff]
    %v704 = vld [vmem:[#allocation7 + $0x30] sm:$0xff]
    %v705 = vld [vmem:[#allocation7 + $0x38] sm:$0xff]
    %v706 = vld [vmem:[#allocation7 + $0x40] sm:$0xff]
    %v707 = vld [vmem:[#allocation7 + $0x48] sm:$0xff]
    %v708 = vld [vmem:[#allocation7 + $0x50] sm:$0xff]
    %v709 = vld [vmem:[#allocation7 + $0x58] sm:$0xff]
    %v710 = vld [vmem:[#allocation7 + $0x60] sm:$0xff]
    %v711 = vld [vmem:[#allocation7 + $0x68] sm:$0xff]
    %v712 = vld [vmem:[#allocation7 + $0x70] sm:$0xff]
    %v713 = vld [vmem:[#allocation7 + $0x78] sm:$0xff]
    %v714 = vld [vmem:[#allocation7 + $0x80] sm:$0xff]
    %v715 = vld [vmem:[#allocation7 + $0x88] sm:$0xff]
    %v716 = vld [vmem:[#allocation7 + $0x90] sm:$0xff]
    %v717 = vld [vmem:[#allocation7 + $0x98] sm:$0xff]
    %v718 = vld [vmem:[#allocation7 + $0xa0] sm:$0xff]
    %v719 = vld [vmem:[#allocation7 + $0xa8] sm:$0xff]
    %v720 = vld [vmem:[#allocation7 + $0xb0] sm:$0xff]
    %v721 = vld [vmem:[#allocation7 + $0xb8] sm:$0xff]
    %v722 = vld [vmem:[#allocation7 + $0xc0] sm:$0xff]
    %v723 = vld [vmem:[#allocation7 + $0xc8] sm:$0xff]
    %v724 = vld [vmem:[#allocation7 + $0xd0] sm:$0xff]
    %v725 = vld [vmem:[#allocation7 + $0xd8] sm:$0xff]
    %v726 = vld [vmem:[#allocation7 + $0xe0] sm:$0xff]
    %v727 = vld [vmem:[#allocation7 + $0xe8] sm:$0xff]
    %v728 = vld [vmem:[#allocation7 + $0xf0] sm:$0xff]
    %v729 = vld [vmem:[#allocation7 + $0xf8] sm:$0xff]
    %v730 = vlaneseq
    %v731 = vshrl.u32 %v730, 7
    %vm732 = vcmp.lt.s32.totalorder %v731, 2
    %v733 = vrot.slane %v697, 4
    %v735 = vunpack.c.l.s4 1983009808
    %v736 = vunpack.c.0.s8 %v735
    %v737 = vlaneseq
    %v738 = vshrl.u32 %v737, 7
    %v739 = vsub.s32 %v736, %v738
    %v740 = vrot.slane %v658, %v739
    %v741 = vcombine.high %v740, %v740
    %v744 = vcombine.low %v733, %v733
    %v746 = vunpack.c.l.s4 1983009808
    %v747 = vunpack.c.0.s8 %v746
    %v748 = vlaneseq
    %v749 = vshrl.u32 %v748, 7
    %v750 = vsub.s32 %v747, %v749
    %v751 = vrot.slane %v744, %v750
    %v752 = vcombine.high %v751, %v751
    %v755 = vsel %vm560, %v740, %v751
    %v756 = vsel %vm560, %v741, %v752
    %vm757 = vcmask 523264
    %v759 = vsel %vm757, 0.0, 0
    %761 = vmatprep.subr.mxu0 %v699
    %762 = vmatpush1.msra.mxu0 %v698
    %763 = vmatprep.subr.mxu0 %v703
    %764 = vmatpush1.msra.mxu0 %v702
    %765 = vmatprep.subr.mxu0 %v707
    %766 = vmatpush1.msra.mxu0 %v706
    %767 = vmatprep.subr.mxu0 %v711
    %768 = vmatpush1.msra.mxu0 %v710
    %769 = vmatprep.subr.mxu0 %v715
    %770 = vmatpush1.msra.mxu0 %v714
    %771 = vmatprep.subr.mxu0 %v719
    %772 = vmatpush1.msra.mxu0 %v718
    %773 = vmatprep.subr.mxu0 %v723
    %774 = vmatpush1.msra.mxu0 %v722
    %775 = vmatprep.subr.mxu0 %v727
    %776 = vmatpush1.msra.mxu0 %v726
    %777 = vmatprep.subr.mxu0 0.0
    %778 = vmatpush1.msra.mxu0 0.0
    %779 = vmatprep.subr.mxu0 0.0
    %780 = vmatpush1.msra.mxu0 0.0
    %781 = vmatprep.subr.mxu0 0.0
    %782 = vmatpush1.msra.mxu0 0.0
    %783 = vmatprep.subr.mxu0 0.0
    %784 = vmatpush1.msra.mxu0 0.0
    %785 = vmatprep.subr.mxu0 0.0
    %786 = vmatpush1.msra.mxu0 0.0
    %787 = vmatprep.subr.mxu0 0.0
    %788 = vmatpush1.msra.mxu0 0.0
    %789 = vmatprep.subr.mxu0 0.0
    %790 = vmatpush1.msra.mxu0 0.0
    %791 = vmatprep.subr.mxu0 0.0
    %792 = vmatpush1.msra.mxu0 0.0
    %793 = vmatprep.subr.mxu0 0.0
    %794 = vmatpush1.msra.mxu0 0.0
    %795 = vmatprep.subr.mxu0 0.0
    %796 = vmatpush1.msra.mxu0 0.0
    %797 = vmatprep.subr.mxu0 0.0
    %798 = vmatpush1.msra.mxu0 0.0
    %799 = vmatprep.subr.mxu0 0.0
    %800 = vmatpush1.msra.mxu0 0.0
    %801 = vmatprep.subr.mxu0 0.0
    %802 = vmatpush1.msra.mxu0 0.0
    %803 = vmatprep.subr.mxu0 0.0
    %804 = vmatpush1.msra.mxu0 0.0
    %805 = vmatprep.subr.mxu0 0.0
    %806 = vmatpush1.msra.mxu0 0.0
    %807 = vmatprep.subr.mxu0 0.0
    %808 = vmatpush1.msra.mxu0 0.0
    %809 = vmatprep.subr.mxu0 0.0
    %810 = vmatpush1.msra.mxu0 0.0
    %811 = vmatprep.subr.mxu0 0.0
    %812 = vmatpush1.msra.mxu0 0.0
    %813 = vmatprep.subr.mxu0 0.0
    %814 = vmatpush1.msra.mxu0 0.0
    %815 = vmatprep.subr.mxu0 0.0
    %816 = vmatpush1.msra.mxu0 0.0
    %817 = vmatprep.subr.mxu0 0.0
    %818 = vmatpush1.msra.mxu0 0.0
    %819 = vmatprep.subr.mxu0 0.0
    %820 = vmatpush1.msra.mxu0 0.0
    %821 = vmatprep.subr.mxu0 0.0
    %822 = vmatpush1.msra.mxu0 0.0
    %823 = vmatprep.subr.mxu0 0.0
    %824 = vmatpush1.msra.mxu0 0.0
    %825 = vmatprep.mubr.f32.mxu0 0.0
    %826 = vmatmul.mubr.f32.gmra.mrb[0].mxu0 %v759
    %v827 = vpop.f32.mrb[0].mxu0
    %v828 = vadd.f32 0.0, %v827
    %v829 = vpop.f32.mrb[0].mxu0
    %v830 = vadd.f32 0.0, %v829
    %831 = vdwg.mxu0
    %832 = vmatprep.subr.mxu0 %v701
    %833 = vmatpush1.msra.mxu0 %v700
    %834 = vmatprep.subr.mxu0 %v705
    %835 = vmatpush1.msra.mxu0 %v704
    %836 = vmatprep.subr.mxu0 %v709
    %837 = vmatpush1.msra.mxu0 %v708
    %838 = vmatprep.subr.mxu0 %v713
    %839 = vmatpush1.msra.mxu0 %v712
    %840 = vmatprep.subr.mxu0 %v717
    %841 = vmatpush1.msra.mxu0 %v716
    %842 = vmatprep.subr.mxu0 %v721
    %843 = vmatpush1.msra.mxu0 %v720
    %844 = vmatprep.subr.mxu0 %v725
    %845 = vmatpush1.msra.mxu0 %v724
    %846 = vmatprep.subr.mxu0 %v729
    %847 = vmatpush1.msra.mxu0 %v728
    %848 = vmatprep.subr.mxu0 0.0
    %849 = vmatpush1.msra.mxu0 0.0
    %850 = vmatprep.subr.mxu0 0.0
    %851 = vmatpush1.msra.mxu0 0.0
    %852 = vmatprep.subr.mxu0 0.0
    %853 = vmatpush1.msra.mxu0 0.0
    %854 = vmatprep.subr.mxu0 0.0
    %855 = vmatpush1.msra.mxu0 0.0
    %856 = vmatprep.subr.mxu0 0.0
    %857 = vmatpush1.msra.mxu0 0.0
    %858 = vmatprep.subr.mxu0 0.0
    %859 = vmatpush1.msra.mxu0 0.0
    %860 = vmatprep.subr.mxu0 0.0
    %861 = vmatpush1.msra.mxu0 0.0
    %862 = vmatprep.subr.mxu0 0.0
    %863 = vmatpush1.msra.mxu0 0.0
    %864 = vmatprep.subr.mxu0 0.0
    %865 = vmatpush1.msra.mxu0 0.0
    %866 = vmatprep.subr.mxu0 0.0
    %867 = vmatpush1.msra.mxu0 0.0
    %868 = vmatprep.subr.mxu0 0.0
    %869 = vmatpush1.msra.mxu0 0.0
    %870 = vmatprep.subr.mxu0 0.0
    %871 = vmatpush1.msra.mxu0 0.0
    %872 = vmatprep.subr.mxu0 0.0
    %873 = vmatpush1.msra.mxu0 0.0
    %874 = vmatprep.subr.mxu0 0.0
    %875 = vmatpush1.msra.mxu0 0.0
    %876 = vmatprep.subr.mxu0 0.0
    %877 = vmatpush1.msra.mxu0 0.0
    %878 = vmatprep.subr.mxu0 0.0
    %879 = vmatpush1.msra.mxu0 0.0
    %880 = vmatprep.subr.mxu0 0.0
    %881 = vmatpush1.msra.mxu0 0.0
    %882 = vmatprep.subr.mxu0 0.0
    %883 = vmatpush1.msra.mxu0 0.0
    %884 = vmatprep.subr.mxu0 0.0
    %885 = vmatpush1.msra.mxu0 0.0
    %886 = vmatprep.subr.mxu0 0.0
    %887 = vmatpush1.msra.mxu0 0.0
    %888 = vmatprep.subr.mxu0 0.0
    %889 = vmatpush1.msra.mxu0 0.0
    %890 = vmatprep.subr.mxu0 0.0
    %891 = vmatpush1.msra.mxu0 0.0
    %892 = vmatprep.subr.mxu0 0.0
    %893 = vmatpush1.msra.mxu0 0.0
    %894 = vmatprep.subr.mxu0 0.0
    %895 = vmatpush1.msra.mxu0 0.0
    %896 = vmatprep.mubr.f32.mxu0 0.0
    %897 = vmatmul.mubr.f32.gmra.mrb[0].mxu0 %v759
    %v898 = vpop.f32.mrb[0].mxu0
    %v899 = vadd.f32 0.0, %v898
    %v900 = vpop.f32.mrb[0].mxu0
    %v901 = vadd.f32 0.0, %v900
    %902 = vdwg.mxu0
    %v903 = vsel %vm732, %v828, %v899
    %v904 = vsel %vm732, %v830, %v901
    %v905 = vadd.f32 %v755, %v903
    %v906 = vadd.f32 %v756, %v904
    %v907 = vxor.u32 %v905, 2147483648
    %v908 = vxor.u32 %v906, 2147483648
    %v909 = vmul.f32 %v907, 1.442695
    %v910 = vpow.pop %v909
    %v911 = vmul.f32 %v908, 1.442695
    %v912 = vpow.pop %v911
    %v913 = vadd.f32 %v910, 1.0
    %v914 = vadd.f32 %v912, 1.0
    %v915 = vrcp.pop %v913
    %v916 = vmul.f32 1.0, %v915
    %v917 = vrcp.pop %v914
    %v918 = vmul.f32 1.0, %v917
    %v919 = vtanh.pop %v906
    %v920 = vmul.f32 %v916, 0.0
    %922 = vrot.lane.b32.xlu0 %v919, 64
    %v923 = vpop.permute.xlu0 %922
    %v925 = vmul.f32 %v916, %v923
    %927 = vrot.lane.b32.xlu0 %v925, 64
    %v928 = vpop.permute.xlu0 %927
    %v930 = vadd.f32 %v920, %v928
    %v931 = vtanh.pop %v930
    %933 = vrot.lane.b32.xlu0 %v931, 64
    %v934 = vpop.permute.xlu0 %933
    %v936 = vmul.f32 %v918, %v934
    %v937 = vrot.slane %v696, 4
    %v939 = vunpack.c.l.s4 1983009808
    %v940 = vunpack.c.0.s8 %v939
    %v941 = vlaneseq
    %v942 = vshrl.u32 %v941, 7
    %v943 = vsub.s32 %v940, %v942
    %v944 = vrot.slane %v659, %v943
    %v945 = vcombine.high %v944, %v944
    %v948 = vcombine.low %v937, %v937
    %v950 = vunpack.c.l.s4 1983009808
    %v951 = vunpack.c.0.s8 %v950
    %v952 = vlaneseq
    %v953 = vshrl.u32 %v952, 7
    %v954 = vsub.s32 %v951, %v953
    %v955 = vrot.slane %v948, %v954
    %v956 = vcombine.high %v955, %v955
    %v959 = vsel %vm560, %v944, %v955
    %v960 = vsel %vm560, %v945, %v956
    %v962 = vsel %vm757, %v936, 0
    %964 = vmatprep.subr.mxu0 %v699
    %965 = vmatpush1.msra.mxu0 %v698
    %966 = vmatprep.subr.mxu0 %v703
    %967 = vmatpush1.msra.mxu0 %v702
    %968 = vmatprep.subr.mxu0 %v707
    %969 = vmatpush1.msra.mxu0 %v706
    %970 = vmatprep.subr.mxu0 %v711
    %971 = vmatpush1.msra.mxu0 %v710
    %972 = vmatprep.subr.mxu0 %v715
    %973 = vmatpush1.msra.mxu0 %v714
    %974 = vmatprep.subr.mxu0 %v719
    %975 = vmatpush1.msra.mxu0 %v718
    %976 = vmatprep.subr.mxu0 %v723
    %977 = vmatpush1.msra.mxu0 %v722
    %978 = vmatprep.subr.mxu0 %v727
    %979 = vmatpush1.msra.mxu0 %v726
    %980 = vmatprep.subr.mxu0 0.0
    %981 = vmatpush1.msra.mxu0 0.0
    %982 = vmatprep.subr.mxu0 0.0
    %983 = vmatpush1.msra.mxu0 0.0
    %984 = vmatprep.subr.mxu0 0.0
    %985 = vmatpush1.msra.mxu0 0.0
    %986 = vmatprep.subr.mxu0 0.0
    %987 = vmatpush1.msra.mxu0 0.0
    %988 = vmatprep.subr.mxu0 0.0
    %989 = vmatpush1.msra.mxu0 0.0
    %990 = vmatprep.subr.mxu0 0.0
    %991 = vmatpush1.msra.mxu0 0.0
    %992 = vmatprep.subr.mxu0 0.0
    %993 = vmatpush1.msra.mxu0 0.0
    %994 = vmatprep.subr.mxu0 0.0
    %995 = vmatpush1.msra.mxu0 0.0
    %996 = vmatprep.subr.mxu0 0.0
    %997 = vmatpush1.msra.mxu0 0.0
    %998 = vmatprep.subr.mxu0 0.0
    %999 = vmatpush1.msra.mxu0 0.0
    %1000 = vmatprep.subr.mxu0 0.0
    %1001 = vmatpush1.msra.mxu0 0.0
    %1002 = vmatprep.subr.mxu0 0.0
    %1003 = vmatpush1.msra.mxu0 0.0
    %1004 = vmatprep.subr.mxu0 0.0
    %1005 = vmatpush1.msra.mxu0 0.0
    %1006 = vmatprep.subr.mxu0 0.0
    %1007 = vmatpush1.msra.mxu0 0.0
    %1008 = vmatprep.subr.mxu0 0.0
    %1009 = vmatpush1.msra.mxu0 0.0
    %1010 = vmatprep.subr.mxu0 0.0
    %1011 = vmatpush1.msra.mxu0 0.0
    %1012 = vmatprep.subr.mxu0 0.0
    %1013 = vmatpush1.msra.mxu0 0.0
    %1014 = vmatprep.subr.mxu0 0.0
    %1015 = vmatpush1.msra.mxu0 0.0
    %1016 = vmatprep.subr.mxu0 0.0
    %1017 = vmatpush1.msra.mxu0 0.0
    %1018 = vmatprep.subr.mxu0 0.0
    %1019 = vmatpush1.msra.mxu0 0.0
    %1020 = vmatprep.subr.mxu0 0.0
    %1021 = vmatpush1.msra.mxu0 0.0
    %1022 = vmatprep.subr.mxu0 0.0
    %1023 = vmatpush1.msra.mxu0 0.0
    %1024 = vmatprep.subr.mxu0 0.0
    %1025 = vmatpush1.msra.mxu0 0.0
    %1026 = vmatprep.subr.mxu0 0.0
    %1027 = vmatpush1.msra.mxu0 0.0
    %1028 = vmatprep.mubr.f32.mxu0 0.0
    %1029 = vmatmul.mubr.f32.gmra.mrb[0].mxu0 %v962
    %v1030 = vpop.f32.mrb[0].mxu0
    %v1031 = vadd.f32 0.0, %v1030
    %v1032 = vpop.f32.mrb[0].mxu0
    %v1033 = vadd.f32 0.0, %v1032
    %1034 = vdwg.mxu0
    %1035 = vmatprep.subr.mxu0 %v701
    %1036 = vmatpush1.msra.mxu0 %v700
    %1037 = vmatprep.subr.mxu0 %v705
    %1038 = vmatpush1.msra.mxu0 %v704
    %1039 = vmatprep.subr.mxu0 %v709
    %1040 = vmatpush1.msra.mxu0 %v708
    %1041 = vmatprep.subr.mxu0 %v713
    %1042 = vmatpush1.msra.mxu0 %v712
    %1043 = vmatprep.subr.mxu0 %v717
    %1044 = vmatpush1.msra.mxu0 %v716
    %1045 = vmatprep.subr.mxu0 %v721
    %1046 = vmatpush1.msra.mxu0 %v720
    %1047 = vmatprep.subr.mxu0 %v725
    %1048 = vmatpush1.msra.mxu0 %v724
    %1049 = vmatprep.subr.mxu0 %v729
    %1050 = vmatpush1.msra.mxu0 %v728
    %1051 = vmatprep.subr.mxu0 0.0
    %1052 = vmatpush1.msra.mxu0 0.0
    %1053 = vmatprep.subr.mxu0 0.0
    %1054 = vmatpush1.msra.mxu0 0.0
    %1055 = vmatprep.subr.mxu0 0.0
    %1056 = vmatpush1.msra.mxu0 0.0
    %1057 = vmatprep.subr.mxu0 0.0
    %1058 = vmatpush1.msra.mxu0 0.0
    %1059 = vmatprep.subr.mxu0 0.0
    %1060 = vmatpush1.msra.mxu0 0.0
    %1061 = vmatprep.subr.mxu0 0.0
    %1062 = vmatpush1.msra.mxu0 0.0
    %1063 = vmatprep.subr.mxu0 0.0
    %1064 = vmatpush1.msra.mxu0 0.0
    %1065 = vmatprep.subr.mxu0 0.0
    %1066 = vmatpush1.msra.mxu0 0.0
    %1067 = vmatprep.subr.mxu0 0.0
    %1068 = vmatpush1.msra.mxu0 0.0
    %1069 = vmatprep.subr.mxu0 0.0
    %1070 = vmatpush1.msra.mxu0 0.0
    %1071 = vmatprep.subr.mxu0 0.0
    %1072 = vmatpush1.msra.mxu0 0.0
    %1073 = vmatprep.subr.mxu0 0.0
    %1074 = vmatpush1.msra.mxu0 0.0
    %1075 = vmatprep.subr.mxu0 0.0
    %1076 = vmatpush1.msra.mxu0 0.0
    %1077 = vmatprep.subr.mxu0 0.0
    %1078 = vmatpush1.msra.mxu0 0.0
    %1079 = vmatprep.subr.mxu0 0.0
    %1080 = vmatpush1.msra.mxu0 0.0
    %1081 = vmatprep.subr.mxu0 0.0
    %1082 = vmatpush1.msra.mxu0 0.0
    %1083 = vmatprep.subr.mxu0 0.0
    %1084 = vmatpush1.msra.mxu0 0.0
    %1085 = vmatprep.subr.mxu0 0.0
    %1086 = vmatpush1.msra.mxu0 0.0
    %1087 = vmatprep.subr.mxu0 0.0
    %1088 = vmatpush1.msra.mxu0 0.0
    %1089 = vmatprep.subr.mxu0 0.0
    %1090 = vmatpush1.msra.mxu0 0.0
    %1091 = vmatprep.subr.mxu0 0.0
    %1092 = vmatpush1.msra.mxu0 0.0
    %1093 = vmatprep.subr.mxu0 0.0
    %1094 = vmatpush1.msra.mxu0 0.0
    %1095 = vmatprep.subr.mxu0 0.0
    %1096 = vmatpush1.msra.mxu0 0.0
    %1097 = vmatprep.subr.mxu0 0.0
    %1098 = vmatpush1.msra.mxu0 0.0
    %1099 = vmatprep.mubr.f32.mxu0 0.0
    %1100 = vmatmul.mubr.f32.gmra.mrb[0].mxu0 %v962
    %v1101 = vpop.f32.mrb[0].mxu0
    %v1102 = vadd.f32 0.0, %v1101
    %v1103 = vpop.f32.mrb[0].mxu0
    %v1104 = vadd.f32 0.0, %v1103
    %1105 = vdwg.mxu0
    %v1106 = vsel %vm732, %v1031, %v1102
    %v1107 = vsel %vm732, %v1033, %v1104
    %v1108 = vadd.f32 %v959, %v1106
    %v1109 = vadd.f32 %v960, %v1107
    %v1110 = vxor.u32 %v1108, 2147483648
    %v1111 = vxor.u32 %v1109, 2147483648
    %v1112 = vmul.f32 %v1110, 1.442695
    %v1113 = vpow.pop %v1112
    %v1114 = vmul.f32 %v1111, 1.442695
    %v1115 = vpow.pop %v1114
    %v1116 = vadd.f32 %v1113, 1.0
    %v1117 = vadd.f32 %v1115, 1.0
    %v1118 = vrcp.pop %v1116
    %v1119 = vmul.f32 1.0, %v1118
    %v1120 = vrcp.pop %v1117
    %v1121 = vmul.f32 1.0, %v1120
    %v1122 = vtanh.pop %v1109
    %v1123 = vmul.f32 %v1119, %v930
    %1125 = vrot.lane.b32.xlu0 %v1122, 64
    %v1126 = vpop.permute.xlu0 %1125
    %v1128 = vmul.f32 %v1119, %v1126
    %1130 = vrot.lane.b32.xlu0 %v1128, 64
    %v1131 = vpop.permute.xlu0 %1130
    %v1133 = vadd.f32 %v1123, %v1131
    %v1134 = vtanh.pop %v1133
    %1136 = vrot.lane.b32.xlu0 %v1134, 64
    %v1137 = vpop.permute.xlu0 %1136
    %v1139 = vmul.f32 %v1121, %v1137
    %v1140 = vrot.slane %v695, 4
    %v1142 = vunpack.c.l.s4 1983009808
    %v1143 = vunpack.c.0.s8 %v1142
    %v1144 = vlaneseq
    %v1145 = vshrl.u32 %v1144, 7
    %v1146 = vsub.s32 %v1143, %v1145
    %v1147 = vrot.slane %v660, %v1146
    %v1148 = vcombine.high %v1147, %v1147
    %v1151 = vcombine.low %v1140, %v1140
    %v1153 = vunpack.c.l.s4 1983009808
    %v1154 = vunpack.c.0.s8 %v1153
    %v1155 = vlaneseq
    %v1156 = vshrl.u32 %v1155, 7
    %v1157 = vsub.s32 %v1154, %v1156
    %v1158 = vrot.slane %v1151, %v1157
    %v1159 = vcombine.high %v1158, %v1158
    %v1162 = vsel %vm560, %v1147, %v1158
    %v1163 = vsel %vm560, %v1148, %v1159
    %v1165 = vsel %vm757, %v1139, 0
    %1167 = vmatprep.subr.mxu0 %v699
    %1168 = vmatpush1.msra.mxu0 %v698
    %1169 = vmatprep.subr.mxu0 %v703
    %1170 = vmatpush1.msra.mxu0 %v702
    %1171 = vmatprep.subr.mxu0 %v707
    %1172 = vmatpush1.msra.mxu0 %v706
    %1173 = vmatprep.subr.mxu0 %v711
    %1174 = vmatpush1.msra.mxu0 %v710
    %1175 = vmatprep.subr.mxu0 %v715
    %1176 = vmatpush1.msra.mxu0 %v714
    %1177 = vmatprep.subr.mxu0 %v719
    %1178 = vmatpush1.msra.mxu0 %v718
    %1179 = vmatprep.subr.mxu0 %v723
    %1180 = vmatpush1.msra.mxu0 %v722
    %1181 = vmatprep.subr.mxu0 %v727
    %1182 = vmatpush1.msra.mxu0 %v726
    %1183 = vmatprep.subr.mxu0 0.0
    %1184 = vmatpush1.msra.mxu0 0.0
    %1185 = vmatprep.subr.mxu0 0.0
    %1186 = vmatpush1.msra.mxu0 0.0
    %1187 = vmatprep.subr.mxu0 0.0
    %1188 = vmatpush1.msra.mxu0 0.0
    %1189 = vmatprep.subr.mxu0 0.0
    %1190 = vmatpush1.msra.mxu0 0.0
    %1191 = vmatprep.subr.mxu0 0.0
    %1192 = vmatpush1.msra.mxu0 0.0
    %1193 = vmatprep.subr.mxu0 0.0
    %1194 = vmatpush1.msra.mxu0 0.0
    %1195 = vmatprep.subr.mxu0 0.0
    %1196 = vmatpush1.msra.mxu0 0.0
    %1197 = vmatprep.subr.mxu0 0.0
    %1198 = vmatpush1.msra.mxu0 0.0
    %1199 = vmatprep.subr.mxu0 0.0
    %1200 = vmatpush1.msra.mxu0 0.0
    %1201 = vmatprep.subr.mxu0 0.0
    %1202 = vmatpush1.msra.mxu0 0.0
    %1203 = vmatprep.subr.mxu0 0.0
    %1204 = vmatpush1.msra.mxu0 0.0
    %1205 = vmatprep.subr.mxu0 0.0
    %1206 = vmatpush1.msra.mxu0 0.0
    %1207 = vmatprep.subr.mxu0 0.0
    %1208 = vmatpush1.msra.mxu0 0.0
    %1209 = vmatprep.subr.mxu0 0.0
    %1210 = vmatpush1.msra.mxu0 0.0
    %1211 = vmatprep.subr.mxu0 0.0
    %1212 = vmatpush1.msra.mxu0 0.0
    %1213 = vmatprep.subr.mxu0 0.0
    %1214 = vmatpush1.msra.mxu0 0.0
    %1215 = vmatprep.subr.mxu0 0.0
    %1216 = vmatpush1.msra.mxu0 0.0
    %1217 = vmatprep.subr.mxu0 0.0
    %1218 = vmatpush1.msra.mxu0 0.0
    %1219 = vmatprep.subr.mxu0 0.0
    %1220 = vmatpush1.msra.mxu0 0.0
    %1221 = vmatprep.subr.mxu0 0.0
    %1222 = vmatpush1.msra.mxu0 0.0
    %1223 = vmatprep.subr.mxu0 0.0
    %1224 = vmatpush1.msra.mxu0 0.0
    %1225 = vmatprep.subr.mxu0 0.0
    %1226 = vmatpush1.msra.mxu0 0.0
    %1227 = vmatprep.subr.mxu0 0.0
    %1228 = vmatpush1.msra.mxu0 0.0
    %1229 = vmatprep.subr.mxu0 0.0
    %1230 = vmatpush1.msra.mxu0 0.0
    %1231 = vmatprep.mubr.f32.mxu0 0.0
    %1232 = vmatmul.mubr.f32.gmra.mrb[0].mxu0 %v1165
    %v1233 = vpop.f32.mrb[0].mxu0
    %v1234 = vadd.f32 0.0, %v1233
    %v1235 = vpop.f32.mrb[0].mxu0
    %v1236 = vadd.f32 0.0, %v1235
    %1237 = vdwg.mxu0
    %1238 = vmatprep.subr.mxu0 %v701
    %1239 = vmatpush1.msra.mxu0 %v700
    %1240 = vmatprep.subr.mxu0 %v705
    %1241 = vmatpush1.msra.mxu0 %v704
    %1242 = vmatprep.subr.mxu0 %v709
    %1243 = vmatpush1.msra.mxu0 %v708
    %1244 = vmatprep.subr.mxu0 %v713
    %1245 = vmatpush1.msra.mxu0 %v712
    %1246 = vmatprep.subr.mxu0 %v717
    %1247 = vmatpush1.msra.mxu0 %v716
    %1248 = vmatprep.subr.mxu0 %v721
    %1249 = vmatpush1.msra.mxu0 %v720
    %1250 = vmatprep.subr.mxu0 %v725
    %1251 = vmatpush1.msra.mxu0 %v724
    %1252 = vmatprep.subr.mxu0 %v729
    %1253 = vmatpush1.msra.mxu0 %v728
    %1254 = vmatprep.subr.mxu0 0.0
    %1255 = vmatpush1.msra.mxu0 0.0
    %1256 = vmatprep.subr.mxu0 0.0
    %1257 = vmatpush1.msra.mxu0 0.0
    %1258 = vmatprep.subr.mxu0 0.0
    %1259 = vmatpush1.msra.mxu0 0.0
    %1260 = vmatprep.subr.mxu0 0.0
    %1261 = vmatpush1.msra.mxu0 0.0
    %1262 = vmatprep.subr.mxu0 0.0
    %1263 = vmatpush1.msra.mxu0 0.0
    %1264 = vmatprep.subr.mxu0 0.0
    %1265 = vmatpush1.msra.mxu0 0.0
    %1266 = vmatprep.subr.mxu0 0.0
    %1267 = vmatpush1.msra.mxu0 0.0
    %1268 = vmatprep.subr.mxu0 0.0
    %1269 = vmatpush1.msra.mxu0 0.0
    %1270 = vmatprep.subr.mxu0 0.0
    %1271 = vmatpush1.msra.mxu0 0.0
    %1272 = vmatprep.subr.mxu0 0.0
    %1273 = vmatpush1.msra.mxu0 0.0
    %1274 = vmatprep.subr.mxu0 0.0
    %1275 = vmatpush1.msra.mxu0 0.0
    %1276 = vmatprep.subr.mxu0 0.0
    %1277 = vmatpush1.msra.mxu0 0.0
    %1278 = vmatprep.subr.mxu0 0.0
    %1279 = vmatpush1.msra.mxu0 0.0
    %1280 = vmatprep.subr.mxu0 0.0
    %1281 = vmatpush1.msra.mxu0 0.0
    %1282 = vmatprep.subr.mxu0 0.0
    %1283 = vmatpush1.msra.mxu0 0.0
    %1284 = vmatprep.subr.mxu0 0.0
    %1285 = vmatpush1.msra.mxu0 0.0
    %1286 = vmatprep.subr.mxu0 0.0
    %1287 = vmatpush1.msra.mxu0 0.0
    %1288 = vmatprep.subr.mxu0 0.0
    %1289 = vmatpush1.msra.mxu0 0.0
    %1290 = vmatprep.subr.mxu0 0.0
    %1291 = vmatpush1.msra.mxu0 0.0
    %1292 = vmatprep.subr.mxu0 0.0
    %1293 = vmatpush1.msra.mxu0 0.0
    %1294 = vmatprep.subr.mxu0 0.0
    %1295 = vmatpush1.msra.mxu0 0.0
    %1296 = vmatprep.subr.mxu0 0.0
    %1297 = vmatpush1.msra.mxu0 0.0
    %1298 = vmatprep.subr.mxu0 0.0
    %1299 = vmatpush1.msra.mxu0 0.0
    %1300 = vmatprep.subr.mxu0 0.0
    %1301 = vmatpush1.msra.mxu0 0.0
    %1302 = vmatprep.mubr.f32.mxu0 0.0
    %1303 = vmatmul.mubr.f32.gmra.mrb[0].mxu0 %v1165
    %v1304 = vpop.f32.mrb[0].mxu0
    %v1305 = vadd.f32 0.0, %v1304
    %v1306 = vpop.f32.mrb[0].mxu0
    %v1307 = vadd.f32 0.0, %v1306
    %1308 = vdwg.mxu0
    %v1309 = vsel %vm732, %v1234, %v1305
    %v1310 = vsel %vm732, %v1236, %v1307
    %v1311 = vadd.f32 %v1162, %v1309
    %v1312 = vadd.f32 %v1163, %v1310
    %v1313 = vxor.u32 %v1311, 2147483648
    %v1314 = vxor.u32 %v1312, 2147483648
    %v1315 = vmul.f32 %v1313, 1.442695
    %v1316 = vpow.pop %v1315
    %v1317 = vmul.f32 %v1314, 1.442695
    %v1318 = vpow.pop %v1317
    %v1319 = vadd.f32 %v1316, 1.0
    %v1320 = vadd.f32 %v1318, 1.0
    %v1321 = vrcp.pop %v1319
    %v1322 = vmul.f32 1.0, %v1321
    %v1323 = vrcp.pop %v1320
    %v1324 = vmul.f32 1.0, %v1323
    %v1325 = vtanh.pop %v1312
    %v1326 = vmul.f32 %v1322, %v1133
    %1328 = vrot.lane.b32.xlu0 %v1325, 64
    %v1329 = vpop.permute.xlu0 %1328
    %v1331 = vmul.f32 %v1322, %v1329
    %1333 = vrot.lane.b32.xlu0 %v1331, 64
    %v1334 = vpop.permute.xlu0 %1333
    %v1336 = vadd.f32 %v1326, %v1334
    %v1337 = vtanh.pop %v1336
    %1339 = vrot.lane.b32.xlu0 %v1337, 64
    %v1340 = vpop.permute.xlu0 %1339
    %v1342 = vmul.f32 %v1324, %v1340
    %v1343 = vrot.slane %v694, 4
    %v1345 = vunpack.c.l.s4 1983009808
    %v1346 = vunpack.c.0.s8 %v1345
    %v1347 = vlaneseq
    %v1348 = vshrl.u32 %v1347, 7
    %v1349 = vsub.s32 %v1346, %v1348
    %v1350 = vrot.slane %v661, %v1349
    %v1351 = vcombine.high %v1350, %v1350
    %v1354 = vcombine.low %v1343, %v1343
    %v1356 = vunpack.c.l.s4 1983009808
    %v1357 = vunpack.c.0.s8 %v1356
    %v1358 = vlaneseq
    %v1359 = vshrl.u32 %v1358, 7
    %v1360 = vsub.s32 %v1357, %v1359
    %v1361 = vrot.slane %v1354, %v1360
    %v1362 = vcombine.high %v1361, %v1361
    %v1365 = vsel %vm560, %v1350, %v1361
    %v1366 = vsel %vm560, %v1351, %v1362
    %v1368 = vsel %vm757, %v1342, 0
    %1370 = vmatprep.subr.mxu0 %v699
    %1371 = vmatpush1.msra.mxu0 %v698
    %1372 = vmatprep.subr.mxu0 %v703
    %1373 = vmatpush1.msra.mxu0 %v702
    %1374 = vmatprep.subr.mxu0 %v707
    %1375 = vmatpush1.msra.mxu0 %v706
    %1376 = vmatprep.subr.mxu0 %v711
    %1377 = vmatpush1.msra.mxu0 %v710
    %1378 = vmatprep.subr.mxu0 %v715
    %1379 = vmatpush1.msra.mxu0 %v714
    %1380 = vmatprep.subr.mxu0 %v719
    %1381 = vmatpush1.msra.mxu0 %v718
    %1382 = vmatprep.subr.mxu0 %v723
    %1383 = vmatpush1.msra.mxu0 %v722
    %1384 = vmatprep.subr.mxu0 %v727
    %1385 = vmatpush1.msra.mxu0 %v726
    %1386 = vmatprep.subr.mxu0 0.0
    %1387 = vmatpush1.msra.mxu0 0.0
    %1388 = vmatprep.subr.mxu0 0.0
    %1389 = vmatpush1.msra.mxu0 0.0
    %1390 = vmatprep.subr.mxu0 0.0
    %1391 = vmatpush1.msra.mxu0 0.0
    %1392 = vmatprep.subr.mxu0 0.0
    %1393 = vmatpush1.msra.mxu0 0.0
    %1394 = vmatprep.subr.mxu0 0.0
    %1395 = vmatpush1.msra.mxu0 0.0
    %1396 = vmatprep.subr.mxu0 0.0
    %1397 = vmatpush1.msra.mxu0 0.0
    %1398 = vmatprep.subr.mxu0 0.0
    %1399 = vmatpush1.msra.mxu0 0.0
    %1400 = vmatprep.subr.mxu0 0.0
    %1401 = vmatpush1.msra.mxu0 0.0
    %1402 = vmatprep.subr.mxu0 0.0
    %1403 = vmatpush1.msra.mxu0 0.0
    %1404 = vmatprep.subr.mxu0 0.0
    %1405 = vmatpush1.msra.mxu0 0.0
    %1406 = vmatprep.subr.mxu0 0.0
    %1407 = vmatpush1.msra.mxu0 0.0
    %1408 = vmatprep.subr.mxu0 0.0
    %1409 = vmatpush1.msra.mxu0 0.0
    %1410 = vmatprep.subr.mxu0 0.0
    %1411 = vmatpush1.msra.mxu0 0.0
    %1412 = vmatprep.subr.mxu0 0.0
    %1413 = vmatpush1.msra.mxu0 0.0
    %1414 = vmatprep.subr.mxu0 0.0
    %1415 = vmatpush1.msra.mxu0 0.0
    %1416 = vmatprep.subr.mxu0 0.0
    %1417 = vmatpush1.msra.mxu0 0.0
    %1418 = vmatprep.subr.mxu0 0.0
    %1419 = vmatpush1.msra.mxu0 0.0
    %1420 = vmatprep.subr.mxu0 0.0
    %1421 = vmatpush1.msra.mxu0 0.0
    %1422 = vmatprep.subr.mxu0 0.0
    %1423 = vmatpush1.msra.mxu0 0.0
    %1424 = vmatprep.subr.mxu0 0.0
    %1425 = vmatpush1.msra.mxu0 0.0
    %1426 = vmatprep.subr.mxu0 0.0
    %1427 = vmatpush1.msra.mxu0 0.0
    %1428 = vmatprep.subr.mxu0 0.0
    %1429 = vmatpush1.msra.mxu0 0.0
    %1430 = vmatprep.subr.mxu0 0.0
    %1431 = vmatpush1.msra.mxu0 0.0
    %1432 = vmatprep.subr.mxu0 0.0
    %1433 = vmatpush1.msra.mxu0 0.0
    %1434 = vmatprep.mubr.f32.mxu0 0.0
    %1435 = vmatmul.mubr.f32.gmra.mrb[0].mxu0 %v1368
    %v1436 = vpop.f32.mrb[0].mxu0
    %v1437 = vadd.f32 0.0, %v1436
    %v1438 = vpop.f32.mrb[0].mxu0
    %v1439 = vadd.f32 0.0, %v1438
    %1440 = vdwg.mxu0
    %1441 = vmatprep.subr.mxu0 %v701
    %1442 = vmatpush1.msra.mxu0 %v700
    %1443 = vmatprep.subr.mxu0 %v705
    %1444 = vmatpush1.msra.mxu0 %v704
    %1445 = vmatprep.subr.mxu0 %v709
    %1446 = vmatpush1.msra.mxu0 %v708
    %1447 = vmatprep.subr.mxu0 %v713
    %1448 = vmatpush1.msra.mxu0 %v712
    %1449 = vmatprep.subr.mxu0 %v717
    %1450 = vmatpush1.msra.mxu0 %v716
    %1451 = vmatprep.subr.mxu0 %v721
    %1452 = vmatpush1.msra.mxu0 %v720
    %1453 = vmatprep.subr.mxu0 %v725
    %1454 = vmatpush1.msra.mxu0 %v724
    %1455 = vmatprep.subr.mxu0 %v729
    %1456 = vmatpush1.msra.mxu0 %v728
    %1457 = vmatprep.subr.mxu0 0.0
    %1458 = vmatpush1.msra.mxu0 0.0
    %1459 = vmatprep.subr.mxu0 0.0
    %1460 = vmatpush1.msra.mxu0 0.0
    %1461 = vmatprep.subr.mxu0 0.0
    %1462 = vmatpush1.msra.mxu0 0.0
    %1463 = vmatprep.subr.mxu0 0.0
    %1464 = vmatpush1.msra.mxu0 0.0
    %1465 = vmatprep.subr.mxu0 0.0
    %1466 = vmatpush1.msra.mxu0 0.0
    %1467 = vmatprep.subr.mxu0 0.0
    %1468 = vmatpush1.msra.mxu0 0.0
    %1469 = vmatprep.subr.mxu0 0.0
    %1470 = vmatpush1.msra.mxu0 0.0
    %1471 = vmatprep.subr.mxu0 0.0
    %1472 = vmatpush1.msra.mxu0 0.0
    %1473 = vmatprep.subr.mxu0 0.0
    %1474 = vmatpush1.msra.mxu0 0.0
    %1475 = vmatprep.subr.mxu0 0.0
    %1476 = vmatpush1.msra.mxu0 0.0
    %1477 = vmatprep.subr.mxu0 0.0
    %1478 = vmatpush1.msra.mxu0 0.0
    %1479 = vmatprep.subr.mxu0 0.0
    %1480 = vmatpush1.msra.mxu0 0.0
    %1481 = vmatprep.subr.mxu0 0.0
    %1482 = vmatpush1.msra.mxu0 0.0
    %1483 = vmatprep.subr.mxu0 0.0
    %1484 = vmatpush1.msra.mxu0 0.0
    %1485 = vmatprep.subr.mxu0 0.0
    %1486 = vmatpush1.msra.mxu0 0.0
    %1487 = vmatprep.subr.mxu0 0.0
    %1488 = vmatpush1.msra.mxu0 0.0
    %1489 = vmatprep.subr.mxu0 0.0
    %1490 = vmatpush1.msra.mxu0 0.0
    %1491 = vmatprep.subr.mxu0 0.0
    %1492 = vmatpush1.msra.mxu0 0.0
    %1493 = vmatprep.subr.mxu0 0.0
    %1494 = vmatpush1.msra.mxu0 0.0
    %1495 = vmatprep.subr.mxu0 0.0
    %1496 = vmatpush1.msra.mxu0 0.0
    %1497 = vmatprep.subr.mxu0 0.0
    %1498 = vmatpush1.msra.mxu0 0.0
    %1499 = vmatprep.subr.mxu0 0.0
    %1500 = vmatpush1.msra.mxu0 0.0
    %1501 = vmatprep.subr.mxu0 0.0
    %1502 = vmatpush1.msra.mxu0 0.0
    %1503 = vmatprep.subr.mxu0 0.0
    %1504 = vmatpush1.msra.mxu0 0.0
    %1505 = vmatprep.mubr.f32.mxu0 0.0
    %1506 = vmatmul.mubr.f32.gmra.mrb[0].mxu0 %v1368
    %v1507 = vpop.f32.mrb[0].mxu0
    %v1508 = vadd.f32 0.0, %v1507
    %v1509 = vpop.f32.mrb[0].mxu0
    %v1510 = vadd.f32 0.0, %v1509
    %1511 = vdwg.mxu0
    %v1512 = vsel %vm732, %v1437, %v1508
    %v1513 = vsel %vm732, %v1439, %v1510
    %v1514 = vadd.f32 %v1365, %v1512
    %v1515 = vadd.f32 %v1366, %v1513
    %v1516 = vxor.u32 %v1514, 2147483648
    %v1517 = vxor.u32 %v1515, 2147483648
    %v1518 = vmul.f32 %v1516, 1.442695
    %v1519 = vpow.pop %v1518
    %v1520 = vmul.f32 %v1517, 1.442695
    %v1521 = vpow.pop %v1520
    %v1522 = vadd.f32 %v1519, 1.0
    %v1523 = vadd.f32 %v1521, 1.0
    %v1524 = vrcp.pop %v1522
    %v1525 = vmul.f32 1.0, %v1524
    %v1526 = vrcp.pop %v1523
    %v1527 = vmul.f32 1.0, %v1526
    %v1528 = vtanh.pop %v1515
    %v1529 = vmul.f32 %v1525, %v1336
    %1531 = vrot.lane.b32.xlu0 %v1528, 64
    %v1532 = vpop.permute.xlu0 %1531
    %v1534 = vmul.f32 %v1525, %v1532
    %1536 = vrot.lane.b32.xlu0 %v1534, 64
    %v1537 = vpop.permute.xlu0 %1536
    %v1539 = vadd.f32 %v1529, %v1537
    %v1540 = vtanh.pop %v1539
    %1542 = vrot.lane.b32.xlu0 %v1540, 64
    %v1543 = vpop.permute.xlu0 %1542
    %v1545 = vmul.f32 %v1527, %v1543
    %v1546 = vrot.slane %v661, 4
    %v1548 = vunpack.c.l.s4 1983009808
    %v1549 = vunpack.c.0.s8 %v1548
    %v1550 = vlaneseq
    %v1551 = vshrl.u32 %v1550, 7
    %v1552 = vsub.s32 %v1549, %v1551
    %v1553 = vrot.slane %v694, %v1552
    %v1554 = vcombine.high %v1553, %v1553
    %v1557 = vcombine.low %v1546, %v1546
    %v1559 = vunpack.c.l.s4 1983009808
    %v1560 = vunpack.c.0.s8 %v1559
    %v1561 = vlaneseq
    %v1562 = vshrl.u32 %v1561, 7
    %v1563 = vsub.s32 %v1560, %v1562
    %v1564 = vrot.slane %v1557, %v1563
    %v1565 = vcombine.high %v1564, %v1564
    %v1568 = vsel %vm560, %v1553, %v1564
    %v1569 = vsel %vm560, %v1554, %v1565
    %v1571 = vsel %vm757, %v1545, 0
    %1573 = vmatprep.subr.mxu0 %v699
    %1574 = vmatpush1.msra.mxu0 %v698
    %1575 = vmatprep.subr.mxu0 %v703
    %1576 = vmatpush1.msra.mxu0 %v702
    %1577 = vmatprep.subr.mxu0 %v707
    %1578 = vmatpush1.msra.mxu0 %v706
    %1579 = vmatprep.subr.mxu0 %v711
    %1580 = vmatpush1.msra.mxu0 %v710
    %1581 = vmatprep.subr.mxu0 %v715
    %1582 = vmatpush1.msra.mxu0 %v714
    %1583 = vmatprep.subr.mxu0 %v719
    %1584 = vmatpush1.msra.mxu0 %v718
    %1585 = vmatprep.subr.mxu0 %v723
    %1586 = vmatpush1.msra.mxu0 %v722
    %1587 = vmatprep.subr.mxu0 %v727
    %1588 = vmatpush1.msra.mxu0 %v726
    %1589 = vmatprep.subr.mxu0 0.0
    %1590 = vmatpush1.msra.mxu0 0.0
    %1591 = vmatprep.subr.mxu0 0.0
    %1592 = vmatpush1.msra.mxu0 0.0
    %1593 = vmatprep.subr.mxu0 0.0
    %1594 = vmatpush1.msra.mxu0 0.0
    %1595 = vmatprep.subr.mxu0 0.0
    %1596 = vmatpush1.msra.mxu0 0.0
    %1597 = vmatprep.subr.mxu0 0.0
    %1598 = vmatpush1.msra.mxu0 0.0
    %1599 = vmatprep.subr.mxu0 0.0
    %1600 = vmatpush1.msra.mxu0 0.0
    %1601 = vmatprep.subr.mxu0 0.0
    %1602 = vmatpush1.msra.mxu0 0.0
    %1603 = vmatprep.subr.mxu0 0.0
    %1604 = vmatpush1.msra.mxu0 0.0
    %1605 = vmatprep.subr.mxu0 0.0
    %1606 = vmatpush1.msra.mxu0 0.0
    %1607 = vmatprep.subr.mxu0 0.0
    %1608 = vmatpush1.msra.mxu0 0.0
    %1609 = vmatprep.subr.mxu0 0.0
    %1610 = vmatpush1.msra.mxu0 0.0
    %1611 = vmatprep.subr.mxu0 0.0
    %1612 = vmatpush1.msra.mxu0 0.0
    %1613 = vmatprep.subr.mxu0 0.0
    %1614 = vmatpush1.msra.mxu0 0.0
    %1615 = vmatprep.subr.mxu0 0.0
    %1616 = vmatpush1.msra.mxu0 0.0
    %1617 = vmatprep.subr.mxu0 0.0
    %1618 = vmatpush1.msra.mxu0 0.0
    %1619 = vmatprep.subr.mxu0 0.0
    %1620 = vmatpush1.msra.mxu0 0.0
    %1621 = vmatprep.subr.mxu0 0.0
    %1622 = vmatpush1.msra.mxu0 0.0
    %1623 = vmatprep.subr.mxu0 0.0
    %1624 = vmatpush1.msra.mxu0 0.0
    %1625 = vmatprep.subr.mxu0 0.0
    %1626 = vmatpush1.msra.mxu0 0.0
    %1627 = vmatprep.subr.mxu0 0.0
    %1628 = vmatpush1.msra.mxu0 0.0
    %1629 = vmatprep.subr.mxu0 0.0
    %1630 = vmatpush1.msra.mxu0 0.0
    %1631 = vmatprep.subr.mxu0 0.0
    %1632 = vmatpush1.msra.mxu0 0.0
    %1633 = vmatprep.subr.mxu0 0.0
    %1634 = vmatpush1.msra.mxu0 0.0
    %1635 = vmatprep.subr.mxu0 0.0
    %1636 = vmatpush1.msra.mxu0 0.0
    %1637 = vmatprep.mubr.f32.mxu0 0.0
    %1638 = vmatmul.mubr.f32.gmra.mrb[0].mxu0 %v1571
    %v1639 = vpop.f32.mrb[0].mxu0
    %v1640 = vadd.f32 0.0, %v1639
    %v1641 = vpop.f32.mrb[0].mxu0
    %v1642 = vadd.f32 0.0, %v1641
    %1643 = vdwg.mxu0
    %1644 = vmatprep.subr.mxu0 %v701
    %1645 = vmatpush1.msra.mxu0 %v700
    %1646 = vmatprep.subr.mxu0 %v705
    %1647 = vmatpush1.msra.mxu0 %v704
    %1648 = vmatprep.subr.mxu0 %v709
    %1649 = vmatpush1.msra.mxu0 %v708
    %1650 = vmatprep.subr.mxu0 %v713
    %1651 = vmatpush1.msra.mxu0 %v712
    %1652 = vmatprep.subr.mxu0 %v717
    %1653 = vmatpush1.msra.mxu0 %v716
    %1654 = vmatprep.subr.mxu0 %v721
    %1655 = vmatpush1.msra.mxu0 %v720
    %1656 = vmatprep.subr.mxu0 %v725
    %1657 = vmatpush1.msra.mxu0 %v724
    %1658 = vmatprep.subr.mxu0 %v729
    %1659 = vmatpush1.msra.mxu0 %v728
    %1660 = vmatprep.subr.mxu0 0.0
    %1661 = vmatpush1.msra.mxu0 0.0
    %1662 = vmatprep.subr.mxu0 0.0
    %1663 = vmatpush1.msra.mxu0 0.0
    %1664 = vmatprep.subr.mxu0 0.0
    %1665 = vmatpush1.msra.mxu0 0.0
    %1666 = vmatprep.subr.mxu0 0.0
    %1667 = vmatpush1.msra.mxu0 0.0
    %1668 = vmatprep.subr.mxu0 0.0
    %1669 = vmatpush1.msra.mxu0 0.0
    %1670 = vmatprep.subr.mxu0 0.0
    %1671 = vmatpush1.msra.mxu0 0.0
    %1672 = vmatprep.subr.mxu0 0.0
    %1673 = vmatpush1.msra.mxu0 0.0
    %1674 = vmatprep.subr.mxu0 0.0
    %1675 = vmatpush1.msra.mxu0 0.0
    %1676 = vmatprep.subr.mxu0 0.0
    %1677 = vmatpush1.msra.mxu0 0.0
    %1678 = vmatprep.subr.mxu0 0.0
    %1679 = vmatpush1.msra.mxu0 0.0
    %1680 = vmatprep.subr.mxu0 0.0
    %1681 = vmatpush1.msra.mxu0 0.0
    %1682 = vmatprep.subr.mxu0 0.0
    %1683 = vmatpush1.msra.mxu0 0.0
    %1684 = vmatprep.subr.mxu0 0.0
    %1685 = vmatpush1.msra.mxu0 0.0
    %1686 = vmatprep.subr.mxu0 0.0
    %1687 = vmatpush1.msra.mxu0 0.0
    %1688 = vmatprep.subr.mxu0 0.0
    %1689 = vmatpush1.msra.mxu0 0.0
    %1690 = vmatprep.subr.mxu0 0.0
    %1691 = vmatpush1.msra.mxu0 0.0
    %1692 = vmatprep.subr.mxu0 0.0
    %1693 = vmatpush1.msra.mxu0 0.0
    %1694 = vmatprep.subr.mxu0 0.0
    %1695 = vmatpush1.msra.mxu0 0.0
    %1696 = vmatprep.subr.mxu0 0.0
    %1697 = vmatpush1.msra.mxu0 0.0
    %1698 = vmatprep.subr.mxu0 0.0
    %1699 = vmatpush1.msra.mxu0 0.0
    %1700 = vmatprep.subr.mxu0 0.0
    %1701 = vmatpush1.msra.mxu0 0.0
    %1702 = vmatprep.subr.mxu0 0.0
    %1703 = vmatpush1.msra.mxu0 0.0
    %1704 = vmatprep.subr.mxu0 0.0
    %1705 = vmatpush1.msra.mxu0 0.0
    %1706 = vmatprep.subr.mxu0 0.0
    %1707 = vmatpush1.msra.mxu0 0.0
    %1708 = vmatprep.mubr.f32.mxu0 0.0
    %1709 = vmatmul.mubr.f32.gmra.mrb[0].mxu0 %v1571
    %v1710 = vpop.f32.mrb[0].mxu0
    %v1711 = vadd.f32 0.0, %v1710
    %v1712 = vpop.f32.mrb[0].mxu0
    %v1713 = vadd.f32 0.0, %v1712
    %1714 = vdwg.mxu0
    %v1715 = vsel %vm732, %v1640, %v1711
    %v1716 = vsel %vm732, %v1642, %v1713
    %v1717 = vadd.f32 %v1568, %v1715
    %v1718 = vadd.f32 %v1569, %v1716
    %v1719 = vxor.u32 %v1717, 2147483648
    %v1720 = vxor.u32 %v1718, 2147483648
    %v1721 = vmul.f32 %v1719, 1.442695
    %v1722 = vpow.pop %v1721
    %v1723 = vmul.f32 %v1720, 1.442695
    %v1724 = vpow.pop %v1723
    %v1725 = vadd.f32 %v1722, 1.0
    %v1726 = vadd.f32 %v1724, 1.0
    %v1727 = vrcp.pop %v1725
    %v1728 = vmul.f32 1.0, %v1727
    %v1729 = vrcp.pop %v1726
    %v1730 = vmul.f32 1.0, %v1729
    %v1731 = vtanh.pop %v1718
    %v1732 = vmul.f32 %v1728, %v1539
    %1734 = vrot.lane.b32.xlu0 %v1731, 64
    %v1735 = vpop.permute.xlu0 %1734
    %v1737 = vmul.f32 %v1728, %v1735
    %1739 = vrot.lane.b32.xlu0 %v1737, 64
    %v1740 = vpop.permute.xlu0 %1739
    %v1742 = vadd.f32 %v1732, %v1740
    %v1743 = vtanh.pop %v1742
    %1745 = vrot.lane.b32.xlu0 %v1743, 64
    %v1746 = vpop.permute.xlu0 %1745
    %v1748 = vmul.f32 %v1730, %v1746
    %v1749 = vrot.slane %v660, 4
    %v1751 = vunpack.c.l.s4 1983009808
    %v1752 = vunpack.c.0.s8 %v1751
    %v1753 = vlaneseq
    %v1754 = vshrl.u32 %v1753, 7
    %v1755 = vsub.s32 %v1752, %v1754
    %v1756 = vrot.slane %v695, %v1755
    %v1757 = vcombine.high %v1756, %v1756
    %v1760 = vcombine.low %v1749, %v1749
    %v1762 = vunpack.c.l.s4 1983009808
    %v1763 = vunpack.c.0.s8 %v1762
    %v1764 = vlaneseq
    %v1765 = vshrl.u32 %v1764, 7
    %v1766 = vsub.s32 %v1763, %v1765
    %v1767 = vrot.slane %v1760, %v1766
    %v1768 = vcombine.high %v1767, %v1767
    %v1771 = vsel %vm560, %v1756, %v1767
    %v1772 = vsel %vm560, %v1757, %v1768
    %v1774 = vsel %vm757, %v1748, 0
    %1776 = vmatprep.subr.mxu0 %v699
    %1777 = vmatpush1.msra.mxu0 %v698
    %1778 = vmatprep.subr.mxu0 %v703
    %1779 = vmatpush1.msra.mxu0 %v702
    %1780 = vmatprep.subr.mxu0 %v707
    %1781 = vmatpush1.msra.mxu0 %v706
    %1782 = vmatprep.subr.mxu0 %v711
    %1783 = vmatpush1.msra.mxu0 %v710
    %1784 = vmatprep.subr.mxu0 %v715
    %1785 = vmatpush1.msra.mxu0 %v714
    %1786 = vmatprep.subr.mxu0 %v719
    %1787 = vmatpush1.msra.mxu0 %v718
    %1788 = vmatprep.subr.mxu0 %v723
    %1789 = vmatpush1.msra.mxu0 %v722
    %1790 = vmatprep.subr.mxu0 %v727
    %1791 = vmatpush1.msra.mxu0 %v726
    %1792 = vmatprep.subr.mxu0 0.0
    %1793 = vmatpush1.msra.mxu0 0.0
    %1794 = vmatprep.subr.mxu0 0.0
    %1795 = vmatpush1.msra.mxu0 0.0
    %1796 = vmatprep.subr.mxu0 0.0
    %1797 = vmatpush1.msra.mxu0 0.0
    %1798 = vmatprep.subr.mxu0 0.0
    %1799 = vmatpush1.msra.mxu0 0.0
    %1800 = vmatprep.subr.mxu0 0.0
    %1801 = vmatpush1.msra.mxu0 0.0
    %1802 = vmatprep.subr.mxu0 0.0
    %1803 = vmatpush1.msra.mxu0 0.0
    %1804 = vmatprep.subr.mxu0 0.0
    %1805 = vmatpush1.msra.mxu0 0.0
    %1806 = vmatprep.subr.mxu0 0.0
    %1807 = vmatpush1.msra.mxu0 0.0
    %1808 = vmatprep.subr.mxu0 0.0
    %1809 = vmatpush1.msra.mxu0 0.0
    %1810 = vmatprep.subr.mxu0 0.0
    %1811 = vmatpush1.msra.mxu0 0.0
    %1812 = vmatprep.subr.mxu0 0.0
    %1813 = vmatpush1.msra.mxu0 0.0
    %1814 = vmatprep.subr.mxu0 0.0
    %1815 = vmatpush1.msra.mxu0 0.0
    %1816 = vmatprep.subr.mxu0 0.0
    %1817 = vmatpush1.msra.mxu0 0.0
    %1818 = vmatprep.subr.mxu0 0.0
    %1819 = vmatpush1.msra.mxu0 0.0
    %1820 = vmatprep.subr.mxu0 0.0
    %1821 = vmatpush1.msra.mxu0 0.0
    %1822 = vmatprep.subr.mxu0 0.0
    %1823 = vmatpush1.msra.mxu0 0.0
    %1824 = vmatprep.subr.mxu0 0.0
    %1825 = vmatpush1.msra.mxu0 0.0
    %1826 = vmatprep.subr.mxu0 0.0
    %1827 = vmatpush1.msra.mxu0 0.0
    %1828 = vmatprep.subr.mxu0 0.0
    %1829 = vmatpush1.msra.mxu0 0.0
    %1830 = vmatprep.subr.mxu0 0.0
    %1831 = vmatpush1.msra.mxu0 0.0
    %1832 = vmatprep.subr.mxu0 0.0
    %1833 = vmatpush1.msra.mxu0 0.0
    %1834 = vmatprep.subr.mxu0 0.0
    %1835 = vmatpush1.msra.mxu0 0.0
    %1836 = vmatprep.subr.mxu0 0.0
    %1837 = vmatpush1.msra.mxu0 0.0
    %1838 = vmatprep.subr.mxu0 0.0
    %1839 = vmatpush1.msra.mxu0 0.0
    %1840 = vmatprep.mubr.f32.mxu0 0.0
    %1841 = vmatmul.mubr.f32.gmra.mrb[0].mxu0 %v1774
    %v1842 = vpop.f32.mrb[0].mxu0
    %v1843 = vadd.f32 0.0, %v1842
    %v1844 = vpop.f32.mrb[0].mxu0
    %v1845 = vadd.f32 0.0, %v1844
    %1846 = vdwg.mxu0
    %1847 = vmatprep.subr.mxu0 %v701
    %1848 = vmatpush1.msra.mxu0 %v700
    %1849 = vmatprep.subr.mxu0 %v705
    %1850 = vmatpush1.msra.mxu0 %v704
    %1851 = vmatprep.subr.mxu0 %v709
    %1852 = vmatpush1.msra.mxu0 %v708
    %1853 = vmatprep.subr.mxu0 %v713
    %1854 = vmatpush1.msra.mxu0 %v712
    %1855 = vmatprep.subr.mxu0 %v717
    %1856 = vmatpush1.msra.mxu0 %v716
    %1857 = vmatprep.subr.mxu0 %v721
    %1858 = vmatpush1.msra.mxu0 %v720
    %1859 = vmatprep.subr.mxu0 %v725
    %1860 = vmatpush1.msra.mxu0 %v724
    %1861 = vmatprep.subr.mxu0 %v729
    %1862 = vmatpush1.msra.mxu0 %v728
    %1863 = vmatprep.subr.mxu0 0.0
    %1864 = vmatpush1.msra.mxu0 0.0
    %1865 = vmatprep.subr.mxu0 0.0
    %1866 = vmatpush1.msra.mxu0 0.0
    %1867 = vmatprep.subr.mxu0 0.0
    %1868 = vmatpush1.msra.mxu0 0.0
    %1869 = vmatprep.subr.mxu0 0.0
    %1870 = vmatpush1.msra.mxu0 0.0
    %1871 = vmatprep.subr.mxu0 0.0
    %1872 = vmatpush1.msra.mxu0 0.0
    %1873 = vmatprep.subr.mxu0 0.0
    %1874 = vmatpush1.msra.mxu0 0.0
    %1875 = vmatprep.subr.mxu0 0.0
    %1876 = vmatpush1.msra.mxu0 0.0
    %1877 = vmatprep.subr.mxu0 0.0
    %1878 = vmatpush1.msra.mxu0 0.0
    %1879 = vmatprep.subr.mxu0 0.0
    %1880 = vmatpush1.msra.mxu0 0.0
    %1881 = vmatprep.subr.mxu0 0.0
    %1882 = vmatpush1.msra.mxu0 0.0
    %1883 = vmatprep.subr.mxu0 0.0
    %1884 = vmatpush1.msra.mxu0 0.0
    %1885 = vmatprep.subr.mxu0 0.0
    %1886 = vmatpush1.msra.mxu0 0.0
    %1887 = vmatprep.subr.mxu0 0.0
    %1888 = vmatpush1.msra.mxu0 0.0
    %1889 = vmatprep.subr.mxu0 0.0
    %1890 = vmatpush1.msra.mxu0 0.0
    %1891 = vmatprep.subr.mxu0 0.0
    %1892 = vmatpush1.msra.mxu0 0.0
    %1893 = vmatprep.subr.mxu0 0.0
    %1894 = vmatpush1.msra.mxu0 0.0
    %1895 = vmatprep.subr.mxu0 0.0
    %1896 = vmatpush1.msra.mxu0 0.0
    %1897 = vmatprep.subr.mxu0 0.0
    %1898 = vmatpush1.msra.mxu0 0.0
    %1899 = vmatprep.subr.mxu0 0.0
    %1900 = vmatpush1.msra.mxu0 0.0
    %1901 = vmatprep.subr.mxu0 0.0
    %1902 = vmatpush1.msra.mxu0 0.0
    %1903 = vmatprep.subr.mxu0 0.0
    %1904 = vmatpush1.msra.mxu0 0.0
    %1905 = vmatprep.subr.mxu0 0.0
    %1906 = vmatpush1.msra.mxu0 0.0
    %1907 = vmatprep.subr.mxu0 0.0
    %1908 = vmatpush1.msra.mxu0 0.0
    %1909 = vmatprep.subr.mxu0 0.0
    %1910 = vmatpush1.msra.mxu0 0.0
    %1911 = vmatprep.mubr.f32.mxu0 0.0
    %1912 = vmatmul.mubr.f32.gmra.mrb[0].mxu0 %v1774
    %v1913 = vpop.f32.mrb[0].mxu0
    %v1914 = vadd.f32 0.0, %v1913
    %v1915 = vpop.f32.mrb[0].mxu0
    %v1916 = vadd.f32 0.0, %v1915
    %1917 = vdwg.mxu0
    %v1918 = vsel %vm732, %v1843, %v1914
    %v1919 = vsel %vm732, %v1845, %v1916
    %v1920 = vadd.f32 %v1771, %v1918
    %v1921 = vadd.f32 %v1772, %v1919
    %v1922 = vxor.u32 %v1920, 2147483648
    %v1923 = vxor.u32 %v1921, 2147483648
    %v1924 = vmul.f32 %v1922, 1.442695
    %v1925 = vpow.pop %v1924
    %v1926 = vmul.f32 %v1923, 1.442695
    %v1927 = vpow.pop %v1926
    %v1928 = vadd.f32 %v1925, 1.0
    %v1929 = vadd.f32 %v1927, 1.0
    %v1930 = vrcp.pop %v1928
    %v1931 = vmul.f32 1.0, %v1930
    %v1932 = vrcp.pop %v1929
    %v1933 = vmul.f32 1.0, %v1932
    %v1934 = vtanh.pop %v1921
    %v1935 = vmul.f32 %v1931, %v1742
    %1937 = vrot.lane.b32.xlu0 %v1934, 64
    %v1938 = vpop.permute.xlu0 %1937
    %v1940 = vmul.f32 %v1931, %v1938
    %1942 = vrot.lane.b32.xlu0 %v1940, 64
    %v1943 = vpop.permute.xlu0 %1942
    %v1945 = vadd.f32 %v1935, %v1943
    %v1946 = vtanh.pop %v1945
    %1948 = vrot.lane.b32.xlu0 %v1946, 64
    %v1949 = vpop.permute.xlu0 %1948
    %v1951 = vmul.f32 %v1933, %v1949
    %v1952 = vrot.slane %v659, 4
    %v1954 = vunpack.c.l.s4 1983009808
    %v1955 = vunpack.c.0.s8 %v1954
    %v1956 = vlaneseq
    %v1957 = vshrl.u32 %v1956, 7
    %v1958 = vsub.s32 %v1955, %v1957
    %v1959 = vrot.slane %v696, %v1958
    %v1960 = vcombine.high %v1959, %v1959
    %v1963 = vcombine.low %v1952, %v1952
    %v1965 = vunpack.c.l.s4 1983009808
    %v1966 = vunpack.c.0.s8 %v1965
    %v1967 = vlaneseq
    %v1968 = vshrl.u32 %v1967, 7
    %v1969 = vsub.s32 %v1966, %v1968
    %v1970 = vrot.slane %v1963, %v1969
    %v1971 = vcombine.high %v1970, %v1970
    %v1974 = vsel %vm560, %v1959, %v1970
    %v1975 = vsel %vm560, %v1960, %v1971
    %v1977 = vsel %vm757, %v1951, 0
    %1979 = vmatprep.subr.mxu0 %v699
    %1980 = vmatpush1.msra.mxu0 %v698
    %1981 = vmatprep.subr.mxu0 %v703
    %1982 = vmatpush1.msra.mxu0 %v702
    %1983 = vmatprep.subr.mxu0 %v707
    %1984 = vmatpush1.msra.mxu0 %v706
    %1985 = vmatprep.subr.mxu0 %v711
    %1986 = vmatpush1.msra.mxu0 %v710
    %1987 = vmatprep.subr.mxu0 %v715
    %1988 = vmatpush1.msra.mxu0 %v714
    %1989 = vmatprep.subr.mxu0 %v719
    %1990 = vmatpush1.msra.mxu0 %v718
    %1991 = vmatprep.subr.mxu0 %v723
    %1992 = vmatpush1.msra.mxu0 %v722
    %1993 = vmatprep.subr.mxu0 %v727
    %1994 = vmatpush1.msra.mxu0 %v726
    %1995 = vmatprep.subr.mxu0 0.0
    %1996 = vmatpush1.msra.mxu0 0.0
    %1997 = vmatprep.subr.mxu0 0.0
    %1998 = vmatpush1.msra.mxu0 0.0
    %1999 = vmatprep.subr.mxu0 0.0
    %2000 = vmatpush1.msra.mxu0 0.0
    %2001 = vmatprep.subr.mxu0 0.0
    %2002 = vmatpush1.msra.mxu0 0.0
    %2003 = vmatprep.subr.mxu0 0.0
    %2004 = vmatpush1.msra.mxu0 0.0
    %2005 = vmatprep.subr.mxu0 0.0
    %2006 = vmatpush1.msra.mxu0 0.0
    %2007 = vmatprep.subr.mxu0 0.0
    %2008 = vmatpush1.msra.mxu0 0.0
    %2009 = vmatprep.subr.mxu0 0.0
    %2010 = vmatpush1.msra.mxu0 0.0
    %2011 = vmatprep.subr.mxu0 0.0
    %2012 = vmatpush1.msra.mxu0 0.0
    %2013 = vmatprep.subr.mxu0 0.0
    %2014 = vmatpush1.msra.mxu0 0.0
    %2015 = vmatprep.subr.mxu0 0.0
    %2016 = vmatpush1.msra.mxu0 0.0
    %2017 = vmatprep.subr.mxu0 0.0
    %2018 = vmatpush1.msra.mxu0 0.0
    %2019 = vmatprep.subr.mxu0 0.0
    %2020 = vmatpush1.msra.mxu0 0.0
    %2021 = vmatprep.subr.mxu0 0.0
    %2022 = vmatpush1.msra.mxu0 0.0
    %2023 = vmatprep.subr.mxu0 0.0
    %2024 = vmatpush1.msra.mxu0 0.0
    %2025 = vmatprep.subr.mxu0 0.0
    %2026 = vmatpush1.msra.mxu0 0.0
    %2027 = vmatprep.subr.mxu0 0.0
    %2028 = vmatpush1.msra.mxu0 0.0
    %2029 = vmatprep.subr.mxu0 0.0
    %2030 = vmatpush1.msra.mxu0 0.0
    %2031 = vmatprep.subr.mxu0 0.0
    %2032 = vmatpush1.msra.mxu0 0.0
    %2033 = vmatprep.subr.mxu0 0.0
    %2034 = vmatpush1.msra.mxu0 0.0
    %2035 = vmatprep.subr.mxu0 0.0
    %2036 = vmatpush1.msra.mxu0 0.0
    %2037 = vmatprep.subr.mxu0 0.0
    %2038 = vmatpush1.msra.mxu0 0.0
    %2039 = vmatprep.subr.mxu0 0.0
    %2040 = vmatpush1.msra.mxu0 0.0
    %2041 = vmatprep.subr.mxu0 0.0
    %2042 = vmatpush1.msra.mxu0 0.0
    %2043 = vmatprep.mubr.f32.mxu0 0.0
    %2044 = vmatmul.mubr.f32.gmra.mrb[0].mxu0 %v1977
    %v2045 = vpop.f32.mrb[0].mxu0
    %v2046 = vadd.f32 0.0, %v2045
    %v2047 = vpop.f32.mrb[0].mxu0
    %v2048 = vadd.f32 0.0, %v2047
    %2049 = vdwg.mxu0
    %2050 = vmatprep.subr.mxu0 %v701
    %2051 = vmatpush1.msra.mxu0 %v700
    %2052 = vmatprep.subr.mxu0 %v705
    %2053 = vmatpush1.msra.mxu0 %v704
    %2054 = vmatprep.subr.mxu0 %v709
    %2055 = vmatpush1.msra.mxu0 %v708
    %2056 = vmatprep.subr.mxu0 %v713
    %2057 = vmatpush1.msra.mxu0 %v712
    %2058 = vmatprep.subr.mxu0 %v717
    %2059 = vmatpush1.msra.mxu0 %v716
    %2060 = vmatprep.subr.mxu0 %v721
    %2061 = vmatpush1.msra.mxu0 %v720
    %2062 = vmatprep.subr.mxu0 %v725
    %2063 = vmatpush1.msra.mxu0 %v724
    %2064 = vmatprep.subr.mxu0 %v729
    %2065 = vmatpush1.msra.mxu0 %v728
    %2066 = vmatprep.subr.mxu0 0.0
    %2067 = vmatpush1.msra.mxu0 0.0
    %2068 = vmatprep.subr.mxu0 0.0
    %2069 = vmatpush1.msra.mxu0 0.0
    %2070 = vmatprep.subr.mxu0 0.0
    %2071 = vmatpush1.msra.mxu0 0.0
    %2072 = vmatprep.subr.mxu0 0.0
    %2073 = vmatpush1.msra.mxu0 0.0
    %2074 = vmatprep.subr.mxu0 0.0
    %2075 = vmatpush1.msra.mxu0 0.0
    %2076 = vmatprep.subr.mxu0 0.0
    %2077 = vmatpush1.msra.mxu0 0.0
    %2078 = vmatprep.subr.mxu0 0.0
    %2079 = vmatpush1.msra.mxu0 0.0
    %2080 = vmatprep.subr.mxu0 0.0
    %2081 = vmatpush1.msra.mxu0 0.0
    %2082 = vmatprep.subr.mxu0 0.0
    %2083 = vmatpush1.msra.mxu0 0.0
    %2084 = vmatprep.subr.mxu0 0.0
    %2085 = vmatpush1.msra.mxu0 0.0
    %2086 = vmatprep.subr.mxu0 0.0
    %2087 = vmatpush1.msra.mxu0 0.0
    %2088 = vmatprep.subr.mxu0 0.0
    %2089 = vmatpush1.msra.mxu0 0.0
    %2090 = vmatprep.subr.mxu0 0.0
    %2091 = vmatpush1.msra.mxu0 0.0
    %2092 = vmatprep.subr.mxu0 0.0
    %2093 = vmatpush1.msra.mxu0 0.0
    %2094 = vmatprep.subr.mxu0 0.0
    %2095 = vmatpush1.msra.mxu0 0.0
    %2096 = vmatprep.subr.mxu0 0.0
    %2097 = vmatpush1.msra.mxu0 0.0
    %2098 = vmatprep.subr.mxu0 0.0
    %2099 = vmatpush1.msra.mxu0 0.0
    %2100 = vmatprep.subr.mxu0 0.0
    %2101 = vmatpush1.msra.mxu0 0.0
    %2102 = vmatprep.subr.mxu0 0.0
    %2103 = vmatpush1.msra.mxu0 0.0
    %2104 = vmatprep.subr.mxu0 0.0
    %2105 = vmatpush1.msra.mxu0 0.0
    %2106 = vmatprep.subr.mxu0 0.0
    %2107 = vmatpush1.msra.mxu0 0.0
    %2108 = vmatprep.subr.mxu0 0.0
    %2109 = vmatpush1.msra.mxu0 0.0
    %2110 = vmatprep.subr.mxu0 0.0
    %2111 = vmatpush1.msra.mxu0 0.0
    %2112 = vmatprep.subr.mxu0 0.0
    %2113 = vmatpush1.msra.mxu0 0.0
    %2114 = vmatprep.mubr.f32.mxu0 0.0
    %2115 = vmatmul.mubr.f32.gmra.mrb[0].mxu0 %v1977
    %v2116 = vpop.f32.mrb[0].mxu0
    %v2117 = vadd.f32 0.0, %v2116
    %v2118 = vpop.f32.mrb[0].mxu0
    %v2119 = vadd.f32 0.0, %v2118
    %2120 = vdwg.mxu0
    %v2121 = vsel %vm732, %v2046, %v2117
    %v2122 = vsel %vm732, %v2048, %v2119
    %v2123 = vadd.f32 %v1974, %v2121
    %v2124 = vadd.f32 %v1975, %v2122
    %v2125 = vxor.u32 %v2123, 2147483648
    %v2126 = vxor.u32 %v2124, 2147483648
    %v2127 = vmul.f32 %v2125, 1.442695
    %v2128 = vpow.pop %v2127
    %v2129 = vmul.f32 %v2126, 1.442695
    %v2130 = vpow.pop %v2129
    %v2131 = vadd.f32 %v2128, 1.0
    %v2132 = vadd.f32 %v2130, 1.0
    %v2133 = vrcp.pop %v2131
    %v2134 = vmul.f32 1.0, %v2133
    %v2135 = vrcp.pop %v2132
    %v2136 = vmul.f32 1.0, %v2135
    %v2137 = vtanh.pop %v2124
    %v2138 = vmul.f32 %v2134, %v1945
    %2140 = vrot.lane.b32.xlu0 %v2137, 64
    %v2141 = vpop.permute.xlu0 %2140
    %v2143 = vmul.f32 %v2134, %v2141
    %2145 = vrot.lane.b32.xlu0 %v2143, 64
    %v2146 = vpop.permute.xlu0 %2145
    %v2148 = vadd.f32 %v2138, %v2146
    %v2149 = vtanh.pop %v2148
    %2151 = vrot.lane.b32.xlu0 %v2149, 64
    %v2152 = vpop.permute.xlu0 %2151
    %v2154 = vmul.f32 %v2136, %v2152
    %v2155 = vrot.slane %v658, 4
    %v2157 = vunpack.c.l.s4 1983009808
    %v2158 = vunpack.c.0.s8 %v2157
    %v2159 = vlaneseq
    %v2160 = vshrl.u32 %v2159, 7
    %v2161 = vsub.s32 %v2158, %v2160
    %v2162 = vrot.slane %v697, %v2161
    %v2163 = vcombine.high %v2162, %v2162
    %v2166 = vcombine.low %v2155, %v2155
    %v2168 = vunpack.c.l.s4 1983009808
    %v2169 = vunpack.c.0.s8 %v2168
    %v2170 = vlaneseq
    %v2171 = vshrl.u32 %v2170, 7
    %v2172 = vsub.s32 %v2169, %v2171
    %v2173 = vrot.slane %v2166, %v2172
    %v2174 = vcombine.high %v2173, %v2173
    %v2177 = vsel %vm560, %v2162, %v2173
    %v2178 = vsel %vm560, %v2163, %v2174
    %v2180 = vsel %vm757, %v2154, 0
    %2182 = vmatprep.subr.mxu0 %v699
    %2183 = vmatpush1.msra.mxu0 %v698
    %2184 = vmatprep.subr.mxu0 %v703
    %2185 = vmatpush1.msra.mxu0 %v702
    %2186 = vmatprep.subr.mxu0 %v707
    %2187 = vmatpush1.msra.mxu0 %v706
    %2188 = vmatprep.subr.mxu0 %v711
    %2189 = vmatpush1.msra.mxu0 %v710
    %2190 = vmatprep.subr.mxu0 %v715
    %2191 = vmatpush1.msra.mxu0 %v714
    %2192 = vmatprep.subr.mxu0 %v719
    %2193 = vmatpush1.msra.mxu0 %v718
    %2194 = vmatprep.subr.mxu0 %v723
    %2195 = vmatpush1.msra.mxu0 %v722
    %2196 = vmatprep.subr.mxu0 %v727
    %2197 = vmatpush1.msra.mxu0 %v726
    %2198 = vmatprep.subr.mxu0 0.0
    %2199 = vmatpush1.msra.mxu0 0.0
    %2200 = vmatprep.subr.mxu0 0.0
    %2201 = vmatpush1.msra.mxu0 0.0
    %2202 = vmatprep.subr.mxu0 0.0
    %2203 = vmatpush1.msra.mxu0 0.0
    %2204 = vmatprep.subr.mxu0 0.0
    %2205 = vmatpush1.msra.mxu0 0.0
    %2206 = vmatprep.subr.mxu0 0.0
    %2207 = vmatpush1.msra.mxu0 0.0
    %2208 = vmatprep.subr.mxu0 0.0
    %2209 = vmatpush1.msra.mxu0 0.0
    %2210 = vmatprep.subr.mxu0 0.0
    %2211 = vmatpush1.msra.mxu0 0.0
    %2212 = vmatprep.subr.mxu0 0.0
    %2213 = vmatpush1.msra.mxu0 0.0
    %2214 = vmatprep.subr.mxu0 0.0
    %2215 = vmatpush1.msra.mxu0 0.0
    %2216 = vmatprep.subr.mxu0 0.0
    %2217 = vmatpush1.msra.mxu0 0.0
    %2218 = vmatprep.subr.mxu0 0.0
    %2219 = vmatpush1.msra.mxu0 0.0
    %2220 = vmatprep.subr.mxu0 0.0
    %2221 = vmatpush1.msra.mxu0 0.0
    %2222 = vmatprep.subr.mxu0 0.0
    %2223 = vmatpush1.msra.mxu0 0.0
    %2224 = vmatprep.subr.mxu0 0.0
    %2225 = vmatpush1.msra.mxu0 0.0
    %2226 = vmatprep.subr.mxu0 0.0
    %2227 = vmatpush1.msra.mxu0 0.0
    %2228 = vmatprep.subr.mxu0 0.0
    %2229 = vmatpush1.msra.mxu0 0.0
    %2230 = vmatprep.subr.mxu0 0.0
    %2231 = vmatpush1.msra.mxu0 0.0
    %2232 = vmatprep.subr.mxu0 0.0
    %2233 = vmatpush1.msra.mxu0 0.0
    %2234 = vmatprep.subr.mxu0 0.0
    %2235 = vmatpush1.msra.mxu0 0.0
    %2236 = vmatprep.subr.mxu0 0.0
    %2237 = vmatpush1.msra.mxu0 0.0
    %2238 = vmatprep.subr.mxu0 0.0
    %2239 = vmatpush1.msra.mxu0 0.0
    %2240 = vmatprep.subr.mxu0 0.0
    %2241 = vmatpush1.msra.mxu0 0.0
    %2242 = vmatprep.subr.mxu0 0.0
    %2243 = vmatpush1.msra.mxu0 0.0
    %2244 = vmatprep.subr.mxu0 0.0
    %2245 = vmatpush1.msra.mxu0 0.0
    %2246 = vmatprep.mubr.f32.mxu0 0.0
    %2247 = vmatmul.mubr.f32.gmra.mrb[0].mxu0 %v2180
    %v2248 = vpop.f32.mrb[0].mxu0
    %v2249 = vadd.f32 0.0, %v2248
    %v2250 = vpop.f32.mrb[0].mxu0
    %v2251 = vadd.f32 0.0, %v2250
    %2252 = vdwg.mxu0
    %2253 = vmatprep.subr.mxu0 %v701
    %2254 = vmatpush1.msra.mxu0 %v700
    %2255 = vmatprep.subr.mxu0 %v705
    %2256 = vmatpush1.msra.mxu0 %v704
    %2257 = vmatprep.subr.mxu0 %v709
    %2258 = vmatpush1.msra.mxu0 %v708
    %2259 = vmatprep.subr.mxu0 %v713
    %2260 = vmatpush1.msra.mxu0 %v712
    %2261 = vmatprep.subr.mxu0 %v717
    %2262 = vmatpush1.msra.mxu0 %v716
    %2263 = vmatprep.subr.mxu0 %v721
    %2264 = vmatpush1.msra.mxu0 %v720
    %2265 = vmatprep.subr.mxu0 %v725
    %2266 = vmatpush1.msra.mxu0 %v724
    %2267 = vmatprep.subr.mxu0 %v729
    %2268 = vmatpush1.msra.mxu0 %v728
    %2269 = vmatprep.subr.mxu0 0.0
    %2270 = vmatpush1.msra.mxu0 0.0
    %2271 = vmatprep.subr.mxu0 0.0
    %2272 = vmatpush1.msra.mxu0 0.0
    %2273 = vmatprep.subr.mxu0 0.0
    %2274 = vmatpush1.msra.mxu0 0.0
    %2275 = vmatprep.subr.mxu0 0.0
    %2276 = vmatpush1.msra.mxu0 0.0
    %2277 = vmatprep.subr.mxu0 0.0
    %2278 = vmatpush1.msra.mxu0 0.0
    %2279 = vmatprep.subr.mxu0 0.0
    %2280 = vmatpush1.msra.mxu0 0.0
    %2281 = vmatprep.subr.mxu0 0.0
    %2282 = vmatpush1.msra.mxu0 0.0
    %2283 = vmatprep.subr.mxu0 0.0
    %2284 = vmatpush1.msra.mxu0 0.0
    %2285 = vmatprep.subr.mxu0 0.0
    %2286 = vmatpush1.msra.mxu0 0.0
    %2287 = vmatprep.subr.mxu0 0.0
    %2288 = vmatpush1.msra.mxu0 0.0
    %2289 = vmatprep.subr.mxu0 0.0
    %2290 = vmatpush1.msra.mxu0 0.0
    %2291 = vmatprep.subr.mxu0 0.0
    %2292 = vmatpush1.msra.mxu0 0.0
    %2293 = vmatprep.subr.mxu0 0.0
    %2294 = vmatpush1.msra.mxu0 0.0
    %2295 = vmatprep.subr.mxu0 0.0
    %2296 = vmatpush1.msra.mxu0 0.0
    %2297 = vmatprep.subr.mxu0 0.0
    %2298 = vmatpush1.msra.mxu0 0.0
    %2299 = vmatprep.subr.mxu0 0.0
    %2300 = vmatpush1.msra.mxu0 0.0
    %2301 = vmatprep.subr.mxu0 0.0
    %2302 = vmatpush1.msra.mxu0 0.0
    %2303 = vmatprep.subr.mxu0 0.0
    %2304 = vmatpush1.msra.mxu0 0.0
    %2305 = vmatprep.subr.mxu0 0.0
    %2306 = vmatpush1.msra.mxu0 0.0
    %2307 = vmatprep.subr.mxu0 0.0
    %2308 = vmatpush1.msra.mxu0 0.0
    %2309 = vmatprep.subr.mxu0 0.0
    %2310 = vmatpush1.msra.mxu0 0.0
    %2311 = vmatprep.subr.mxu0 0.0
    %2312 = vmatpush1.msra.mxu0 0.0
    %2313 = vmatprep.subr.mxu0 0.0
    %2314 = vmatpush1.msra.mxu0 0.0
    %2315 = vmatprep.subr.mxu0 0.0
    %2316 = vmatpush1.msra.mxu0 0.0
    %2317 = vmatprep.mubr.f32.mxu0 0.0
    %2318 = vmatmul.mubr.f32.gmra.mrb[0].mxu0 %v2180
    %v2319 = vpop.f32.mrb[0].mxu0
    %v2320 = vadd.f32 0.0, %v2319
    %v2321 = vpop.f32.mrb[0].mxu0
    %v2322 = vadd.f32 0.0, %v2321
    %2323 = vdwg.mxu0
    %v2324 = vsel %vm732, %v2249, %v2320
    %v2325 = vsel %vm732, %v2251, %v2322
    %v2326 = vadd.f32 %v2177, %v2324
    %v2327 = vadd.f32 %v2178, %v2325
    %v2328 = vxor.u32 %v2326, 2147483648
    %v2329 = vxor.u32 %v2327, 2147483648
    %v2330 = vmul.f32 %v2328, 1.442695
    %v2331 = vpow.pop %v2330
    %v2332 = vmul.f32 %v2329, 1.442695
    %v2333 = vpow.pop %v2332
    %v2334 = vadd.f32 %v2331, 1.0
    %v2335 = vadd.f32 %v2333, 1.0
    %v2336 = vrcp.pop %v2334
    %v2337 = vmul.f32 1.0, %v2336
    %v2338 = vrcp.pop %v2335
    %v2339 = vmul.f32 1.0, %v2338
    %v2340 = vtanh.pop %v2327
    %v2341 = vmul.f32 %v2337, %v2148
    %2343 = vrot.lane.b32.xlu0 %v2340, 64
    %v2344 = vpop.permute.xlu0 %2343
    %v2346 = vmul.f32 %v2337, %v2344
    %2348 = vrot.lane.b32.xlu0 %v2346, 64
    %v2349 = vpop.permute.xlu0 %2348
    %v2351 = vadd.f32 %v2341, %v2349
    %v2352 = vtanh.pop %v2351
    %2354 = vrot.lane.b32.xlu0 %v2352, 64
    %v2355 = vpop.permute.xlu0 %2354
    %v2357 = vmul.f32 %v2339, %v2355
    %v2358 = vld [vmem:[%s3] sm:$0xff]
    %v2359 = vld [vmem:[%s3 + $0x8] sm:$0xff]
    %v2360 = vld [vmem:[%s3 + $0x10] sm:$0xff]
    %v2361 = vld [vmem:[%s3 + $0x18] sm:$0xff]
    %v2362 = vld [vmem:[%s3 + $0x20] sm:$0xff]
    %v2363 = vld [vmem:[%s3 + $0x28] sm:$0xff]
    %v2364 = vld [vmem:[%s3 + $0x30] sm:$0xff]
    %v2365 = vld [vmem:[%s3 + $0x38] sm:$0xff]
    %v2366 = vld [vmem:[%s3 + $0x40] sm:$0xff]
    %v2367 = vld [vmem:[%s3 + $0x48] sm:$0xff]
    %v2368 = vld [vmem:[%s3 + $0x50] sm:$0xff]
    %v2369 = vld [vmem:[%s3 + $0x58] sm:$0xff]
    %v2370 = vld [vmem:[%s3 + $0x60] sm:$0xff]
    %v2371 = vld [vmem:[%s3 + $0x68] sm:$0xff]
    %v2372 = vld [vmem:[%s3 + $0x70] sm:$0xff]
    %v2373 = vld [vmem:[%s3 + $0x78] sm:$0xff]
    %v2374 = vld [vmem:[%s3 + $0x80] sm:$0x1]
    %v2376 = vrot.slane %v2357, 2
    %v2377 = vsel %vm757, %v2376, 0
    %2379 = vmatprep.subr.mxu0 0.0
    %2380 = vmatpush1.msra.mxu0 %v2366
    %2381 = vmatprep.subr.mxu0 0.0
    %2382 = vmatpush1.msra.mxu0 %v2367
    %2383 = vmatprep.subr.mxu0 0.0
    %2384 = vmatpush1.msra.mxu0 %v2368
    %2385 = vmatprep.subr.mxu0 0.0
    %2386 = vmatpush1.msra.mxu0 %v2369
    %2387 = vmatprep.subr.mxu0 0.0
    %2388 = vmatpush1.msra.mxu0 %v2370
    %2389 = vmatprep.subr.mxu0 0.0
    %2390 = vmatpush1.msra.mxu0 %v2371
    %2391 = vmatprep.subr.mxu0 0.0
    %2392 = vmatpush1.msra.mxu0 %v2372
    %2393 = vmatprep.subr.mxu0 0.0
    %2394 = vmatpush1.msra.mxu0 %v2373
    %2395 = vmatprep.subr.mxu0 0.0
    %2396 = vmatpush1.msra.mxu0 0.0
    %2397 = vmatprep.subr.mxu0 0.0
    %2398 = vmatpush1.msra.mxu0 0.0
    %2399 = vmatprep.subr.mxu0 0.0
    %2400 = vmatpush1.msra.mxu0 0.0
    %2401 = vmatprep.subr.mxu0 0.0
    %2402 = vmatpush1.msra.mxu0 0.0
    %2403 = vmatprep.subr.mxu0 0.0
    %2404 = vmatpush1.msra.mxu0 0.0
    %2405 = vmatprep.subr.mxu0 0.0
    %2406 = vmatpush1.msra.mxu0 0.0
    %2407 = vmatprep.subr.mxu0 0.0
    %2408 = vmatpush1.msra.mxu0 0.0
    %2409 = vmatprep.subr.mxu0 0.0
    %2410 = vmatpush1.msra.mxu0 0.0
    %2411 = vmatprep.subr.mxu0 0.0
    %2412 = vmatpush1.msra.mxu0 0.0
    %2413 = vmatprep.subr.mxu0 0.0
    %2414 = vmatpush1.msra.mxu0 0.0
    %2415 = vmatprep.subr.mxu0 0.0
    %2416 = vmatpush1.msra.mxu0 0.0
    %2417 = vmatprep.subr.mxu0 0.0
    %2418 = vmatpush1.msra.mxu0 0.0
    %2419 = vmatprep.subr.mxu0 0.0
    %2420 = vmatpush1.msra.mxu0 0.0
    %2421 = vmatprep.subr.mxu0 0.0
    %2422 = vmatpush1.msra.mxu0 0.0
    %2423 = vmatprep.subr.mxu0 0.0
    %2424 = vmatpush1.msra.mxu0 0.0
    %2425 = vmatprep.subr.mxu0 0.0
    %2426 = vmatpush1.msra.mxu0 0.0
    %2427 = vmatprep.subr.mxu0 0.0
    %2428 = vmatpush1.msra.mxu0 0.0
    %2429 = vmatprep.subr.mxu0 0.0
    %2430 = vmatpush1.msra.mxu0 0.0
    %2431 = vmatprep.subr.mxu0 0.0
    %2432 = vmatpush1.msra.mxu0 0.0
    %2433 = vmatprep.subr.mxu0 0.0
    %2434 = vmatpush1.msra.mxu0 0.0
    %2435 = vmatprep.subr.mxu0 0.0
    %2436 = vmatpush1.msra.mxu0 0.0
    %2437 = vmatprep.subr.mxu0 0.0
    %2438 = vmatpush1.msra.mxu0 0.0
    %2439 = vmatprep.subr.mxu0 0.0
    %2440 = vmatpush1.msra.mxu0 0.0
    %2441 = vmatprep.subr.mxu0 0.0
    %2442 = vmatpush1.msra.mxu0 0.0
    %2443 = vmatprep.mubr.f32.mxu0 0.0
    %2444 = vmatmul.mubr.f32.gmra.mrb[0].mxu0 %v2377
    %v2445 = vpop.f32.mrb[0].mxu0
    %v2446 = vadd.f32 0.0, %v2445
    %v2447 = vpop.f32.mrb[0].mxu0
    %2448 = vdwg.mxu0
    %v2449 = vsel %vm757, %v2357, 0
    %2451 = vmatprep.subr.mxu0 0.0
    %2452 = vmatpush1.msra.mxu0 %v2358
    %2453 = vmatprep.subr.mxu0 0.0
    %2454 = vmatpush1.msra.mxu0 %v2359
    %2455 = vmatprep.subr.mxu0 0.0
    %2456 = vmatpush1.msra.mxu0 %v2360
    %2457 = vmatprep.subr.mxu0 0.0
    %2458 = vmatpush1.msra.mxu0 %v2361
    %2459 = vmatprep.subr.mxu0 0.0
    %2460 = vmatpush1.msra.mxu0 %v2362
    %2461 = vmatprep.subr.mxu0 0.0
    %2462 = vmatpush1.msra.mxu0 %v2363
    %2463 = vmatprep.subr.mxu0 0.0
    %2464 = vmatpush1.msra.mxu0 %v2364
    %2465 = vmatprep.subr.mxu0 0.0
    %2466 = vmatpush1.msra.mxu0 %v2365
    %2467 = vmatprep.subr.mxu0 0.0
    %2468 = vmatpush1.msra.mxu0 0.0
    %2469 = vmatprep.subr.mxu0 0.0
    %2470 = vmatpush1.msra.mxu0 0.0
    %2471 = vmatprep.subr.mxu0 0.0
    %2472 = vmatpush1.msra.mxu0 0.0
    %2473 = vmatprep.subr.mxu0 0.0
    %2474 = vmatpush1.msra.mxu0 0.0
    %2475 = vmatprep.subr.mxu0 0.0
    %2476 = vmatpush1.msra.mxu0 0.0
    %2477 = vmatprep.subr.mxu0 0.0
    %2478 = vmatpush1.msra.mxu0 0.0
    %2479 = vmatprep.subr.mxu0 0.0
    %2480 = vmatpush1.msra.mxu0 0.0
    %2481 = vmatprep.subr.mxu0 0.0
    %2482 = vmatpush1.msra.mxu0 0.0
    %2483 = vmatprep.subr.mxu0 0.0
    %2484 = vmatpush1.msra.mxu0 0.0
    %2485 = vmatprep.subr.mxu0 0.0
    %2486 = vmatpush1.msra.mxu0 0.0
    %2487 = vmatprep.subr.mxu0 0.0
    %2488 = vmatpush1.msra.mxu0 0.0
    %2489 = vmatprep.subr.mxu0 0.0
    %2490 = vmatpush1.msra.mxu0 0.0
    %2491 = vmatprep.subr.mxu0 0.0
    %2492 = vmatpush1.msra.mxu0 0.0
    %2493 = vmatprep.subr.mxu0 0.0
    %2494 = vmatpush1.msra.mxu0 0.0
    %2495 = vmatprep.subr.mxu0 0.0
    %2496 = vmatpush1.msra.mxu0 0.0
    %2497 = vmatprep.subr.mxu0 0.0
    %2498 = vmatpush1.msra.mxu0 0.0
    %2499 = vmatprep.subr.mxu0 0.0
    %2500 = vmatpush1.msra.mxu0 0.0
    %2501 = vmatprep.subr.mxu0 0.0
    %2502 = vmatpush1.msra.mxu0 0.0
    %2503 = vmatprep.subr.mxu0 0.0
    %2504 = vmatpush1.msra.mxu0 0.0
    %2505 = vmatprep.subr.mxu0 0.0
    %2506 = vmatpush1.msra.mxu0 0.0
    %2507 = vmatprep.subr.mxu0 0.0
    %2508 = vmatpush1.msra.mxu0 0.0
    %2509 = vmatprep.subr.mxu0 0.0
    %2510 = vmatpush1.msra.mxu0 0.0
    %2511 = vmatprep.subr.mxu0 0.0
    %2512 = vmatpush1.msra.mxu0 0.0
    %2513 = vmatprep.subr.mxu0 0.0
    %2514 = vmatpush1.msra.mxu0 0.0
    %2515 = vmatprep.mubr.f32.mxu0 0.0
    %2516 = vmatmul.mubr.f32.gmra.mrb[0].mxu0 %v2449
    %v2517 = vpop.f32.mrb[0].mxu0
    %v2518 = vadd.f32 %v2446, %v2517
    %v2519 = vpop.f32.mrb[0].mxu0
    %2520 = vdwg.mxu0
    %v2521 = vlaneseq
    %v2522 = vshrl.u32 %v2521, 7
    %v2523 = vsub.s32 0, %v2522
    %v2524 = vrot.slane %v2374, %v2523
    %v2525 = vadd.f32 %v2518, %v2524
    %vm2526 = vcmask 25600
    %v2527 = vsel %vm2526, %v2525, -inf
    %2528 = vmax.xlane.f32.xlu0 %v2527
    %v2529 = vpop.xlane.xlu0 %2528
    %v2530 = vsub.f32 %v2525, %v2529
    %v2531 = vmul.f32 %v2530, 1.442695
    %v2532 = vpow.pop %v2531
    %v2533 = vsel %vm2526, %v2532, 0.0
    %2534 = vadd.xlane.f32.xlu0 %v2533
    %v2535 = vpop.xlane.xlu0 %2534
    %v2536 = vrcp.pop %v2535
    %v2537 = vmul.f32 %v2532, %v2536
    %2538 = vst.msk [vmem:[#allocation9] sm:$0x3] %vm2526, %v2537
    // Predicated region
    $region30: #{text_model_forward.1} parent=1 // pred_check
      _
    $region31: #{text_model_forward.1} parent=1 // pred_check_branch
      %2540 = sbr.rel (0) target = $region33
    $region32: #{text_model_forward.1} parent=1 // pred_region
      %s2542 = ssub.s32 32, 32
      %2543 = vsyncadd [#allocation4], %s2542
      %s2545 = sshll.u32 [#allocation9], 4
      %s2546 = int_to_ptr.vmem [resolvable:$true] %s2545
      %2548 = dma.vmem_to_hbm [thread:$0]  %s2546, 32, %s4, [#allocation4]
    $region33: #{text_model_forward.1} parent=1 // pred_fallthru
      _
    // Predicated region
    $region34: #{text_model_forward.1} parent=1 // pred_check
      _
    $region35: #{text_model_forward.1} parent=1 // pred_check_branch
      %2550 = sbr.rel (0) target = $region37
    $region36: #{text_model_forward.1} parent=1 // pred_region
      %2551 = dma.done [#allocation4], 32
    $region37: #{text_model_forward.1} parent=1 // pred_fallthru
      _
    %2552 = vsyncpa [#allocation3], 1
    %2553 = vsyncpa [#allocation8], 1
    %2554 = vsyncpa [#allocation4], 1
    %2555 = vsyncpa [#allocation5], 1

</llo_original>
